<compile_context>
chip_gen: v5e
topology: v5e:2x2
jax: 0.10.0
libtpu: 0.0.40
codegen_flags: <defaults>
</compile_context>

<pallas_src>
import functools

import jax
import jax.numpy as jnp
from jax.experimental import pallas as pl
from jax.experimental.pallas import tpu as pltpu


_LANE = 128
_BN_EPS = 1e-5
_STEM_C = 40
_HEAD_C = 1536
_DW_ROW_BUDGET = 24 << 20     # per-tile VMEM budget for the dwconv (safe on v5e/v6e/v7x)

# (expand_ratio, kernel, stride, c_in, c_out, repeats) -- B3 widths/depths.
_B3_STAGES = [
    (1, 3, 1, 40, 24, 2),
    (6, 3, 2, 24, 32, 3),
    (6, 5, 2, 32, 48, 3),
    (6, 3, 2, 48, 96, 5),
    (6, 5, 1, 96, 136, 5),
    (6, 5, 2, 136, 232, 6),
    (6, 3, 1, 232, 384, 2),
]


def _round_up(x, m):
    return ((x + m - 1) // m) * m


def _pad_c(c):
    return _round_up(c, _LANE)


def _vmem_limit(est_bytes):
    # Explicit scoped-VMEM limit: at least the 32 MiB default, capped at v7x's 64 MiB.
    return int(min(max(est_bytes + (4 << 20), 32 << 20), 64 << 20))


def _silu(y):
    # y * sigmoid(y) via the EUP approx reciprocal (halves transcendental work).
    return y * pl.reciprocal(1.0 + jnp.exp(-y), approx=True)


# ----------------------------- matmul + BN (+SiLU) --------------------------

def _matmul_bn_act_kernel(a_ref, w_ref, s_ref, b_ref, o_ref, *, act):
    y = jnp.dot(a_ref[...], w_ref[...], preferred_element_type=jnp.float32)
    y = y * s_ref[...] + b_ref[...]            # folded BatchNorm (f32)
    if act == "silu":
        y = _silu(y)
    o_ref[...] = y.astype(o_ref.dtype)


def matmul_bn_act(a, w, scale, bias, act=None, tm_cap=256, tn_cap=512):
    """(M,K)bf16 @ (K,N)bf16 -> bf16, fused folded-BN + optional SiLU.

    Fixed row tile (ragged last block allowed); when several out-channel tiles exist
    they form the OUTER grid dim so the weight block stays VMEM-resident."""
    M, K = a.shape
    Nout = w.shape[1]
    tm = min(M, tm_cap)
    tn = min(Nout, tn_cap)
    gm, gn = pl.cdiv(M, tm), pl.cdiv(Nout, tn)

    if gn > 1:                                 # W re-streamed otherwise -> j outermost
        grid = (gn, gm)
        a_map = lambda j, i: (i, 0)
        w_map = lambda j, i: (0, j)
        o_map = lambda j, i: (i, j)
    else:                                      # single W tile: keep big dim leading
        grid = (gm, gn)
        a_map = lambda i, j: (i, 0)
        w_map = lambda i, j: (0, j)
        o_map = lambda i, j: (i, j)

    est = 2 * (tm * K * 2 + K * tn * 2 + tm * tn * 2 + 4 * tn * 4) + 2 * tm * tn * 4
    return pl.pallas_call(
        functools.partial(_matmul_bn_act_kernel, act=act),
        out_shape=jax.ShapeDtypeStruct((M, Nout), jnp.bfloat16),
        grid=grid,
        in_specs=[
            pl.BlockSpec((tm, K), a_map),
            pl.BlockSpec((K, tn), w_map),
            pl.BlockSpec((1, tn), w_map),
            pl.BlockSpec((1, tn), w_map),
        ],
        out_specs=pl.BlockSpec((tm, tn), o_map),
        compiler_params=pltpu.CompilerParams(
            dimension_semantics=("parallel", "parallel"),
            vmem_limit_bytes=_vmem_limit(est)),
    )(a, w, scale.reshape(1, Nout), bias.reshape(1, Nout))


# ------------------- depthwise conv + BN + SiLU + SE pool -------------------

def _dwconv_kernel(p_ref, w_ref, s_ref, b_ref, o_ref, pool_ref, *,
                   groups, Ho, Wo, TH, T, inv_hw):
    """Depthwise kxk conv from halo'd row-tile planes + BN + SiLU + partial avg pool."""
    acc = None
    for (pi, ox, rows) in groups:
        # one sublane (W-axis) shift per unique (plane, dx); reused across row offsets
        col = p_ref[pi, :, ox:ox + Wo, :]                       # bf16 (TH+halo, Wo, C)
        for (ti, oy) in rows:
            term = col[oy:oy + TH].astype(jnp.float32) * w_ref[ti]   # lazy f32 cast
            acc = term if acc is None else acc + term
    y = acc * s_ref[...] + b_ref[...]                           # folded BatchNorm
    y = _silu(y)
    o_ref[...] = y.astype(o_ref.dtype)
    if T > 1:                                                   # mask ragged last tile
        valid = Ho - (pl.program_id(0) % T) * TH
        rows_i = jax.lax.broadcasted_iota(jnp.int32, (TH, Wo, 1), 0)
        y = jnp.where(rows_i < valid, y, 0.0)
    pool_ref[...] = (jnp.sum(y, axis=(0, 1)) * inv_hw)[None, :]


def _dw_planes(x, k, stride):
    """Spatially pad once; for stride 2 split into 4 parity planes so the kernel only
    needs contiguous shifted slices (no in-kernel strided access, no k*k HBM blowup)."""
    N, H, W, C = x.shape
    pad = (k - 1) // 2
    Ho = (H + 2 * pad - k) // stride + 1
    Wo = (W + 2 * pad - k) // stride + 1
    if stride == 1:
        xp = jnp.pad(x, ((0, 0), (pad, pad), (pad, pad), (0, 0)))
        planes = xp[:, None]                    # (N, 1, Ho+k-1, Wo+k-1, C)
        taps = [(0, dy, dx) for dy in range(k) for dx in range(k)]
    else:                                       # stride == 2
        q = (k - 1) // 2
        Hh, Wh = Ho + q, Wo + q
        xp = jnp.pad(x, ((0, 0), (pad, 2 * Hh - H - pad),
                         (pad, 2 * Wh - W - pad), (0, 0)))
        planes = jnp.stack([xp[:, ry::2, rx::2, :]
                            for ry in range(2) for rx in range(2)], axis=1)
        taps = [((dy % 2) * 2 + (dx % 2), dy // 2, dx // 2)
                for dy in range(k) for dx in range(k)]
    return planes, taps, Ho, Wo


def _group_taps(taps):
    groups = {}
    for ti, (pi, oy, ox) in enumerate(taps):
        groups.setdefault((pi, ox), []).append((ti, oy))
    return tuple((pi, ox, tuple(rows)) for (pi, ox), rows in sorted(groups.items()))


def _dw_row_tile(Ho, Wo, Wh, C, P, halo, budget):
    """Largest output-row tile whose double-buffered blocks + f32 temporaries fit budget."""
    per_row_in = P * Wh * C * 2 * 2             # bf16 input rows, double-buffered
    per_row_out = Wo * C * (2 * 2 + 3 * 4)      # bf16 out (db) + ~3 f32 temporaries
    fixed = halo * P * Wh * C * 2 * 2
    th = (budget - fixed) // (per_row_in + per_row_out)
    return int(max(1, min(Ho, th)))


def _split_rows(planes, TH, T, halo):
    """Pre-split halo'd row tiles: (N,P,Hh,Wh,C) -> (N*T, P, TH+halo, Wh, C)."""
    N, P, Hh, Wh, C = planes.shape
    need = T * TH + halo
    if need > Hh:
        planes = jnp.pad(planes, ((0, 0), (0, 0), (0, need - Hh), (0, 0), (0, 0)))
    tiles = jnp.stack(
        [jax.lax.slice_in_dim(planes, i * TH, i * TH + TH + halo, axis=2)
         for i in range(T)], axis=1)
    return tiles.reshape(N * T, P, TH + halo, Wh, C)


def dwconv_bn_silu_pool(x, w, scale, bias, *, k, stride, row_budget=_DW_ROW_BUDGET):
    """x: (N,H,W,C) bf16 -> ((N,Ho,Wo,C) bf16, (N,C) f32 spatial mean).

    Spatially tiled: flattened (N * row_tiles) parallel grid; VMEM bounded per tile."""
    planes, taps, Ho, Wo = _dw_planes(x, k, stride)
    N, P, Hh, Wh, C = planes.shape
    halo = Hh - Ho
    TH = _dw_row_tile(Ho, Wo, Wh, C, P, halo, row_budget)
    T = pl.cdiv(Ho, TH)
    Hin = TH + halo
    tiled = planes if T == 1 else _split_rows(planes, TH, T, halo)
    groups = _group_taps(taps)

    est = (2 * (P * Hin * Wh * C * 2 + TH * Wo * C * 2 + C * 4)
           + 3 * TH * Wo * C * 4 + k * k * C * 4 + 2 * C * 4)
    out, pool = pl.pallas_call(
        functools.partial(_dwconv_kernel, groups=groups, Ho=Ho, Wo=Wo, TH=TH, T=T,
                          inv_hw=1.0 / (Ho * Wo)),
        out_shape=(jax.ShapeDtypeStruct((N * T, TH, Wo, C), jnp.bfloat16),
                   jax.ShapeDtypeStruct((N * T, 1, C), jnp.float32)),
        grid=(N * T,),
        in_specs=[
            pl.BlockSpec((None, P, Hin, Wh, C), lambda g: (g, 0, 0, 0, 0)),
            pl.BlockSpec((k * k, C), lambda g: (0, 0)),
            pl.BlockSpec((1, C), lambda g: (0, 0)),
            pl.BlockSpec((1, C), lambda g: (0, 0)),
        ],
        out_specs=(pl.BlockSpec((None, TH, Wo, C), lambda g: (g, 0, 0, 0)),
                   pl.BlockSpec((None, 1, C), lambda g: (g, 0, 0))),
        compiler_params=pltpu.CompilerParams(
            dimension_semantics=("parallel",),
            vmem_limit_bytes=_vmem_limit(est)),
    )(tiled, w, scale.reshape(1, C), bias.reshape(1, C))

    out = out.reshape(N, T * TH, Wo, C)
    if T * TH != Ho:
        out = out[:, :Ho]
    pool = jnp.sum(pool.reshape(N, T, C), axis=1)
    return out, pool


# -------------- project 1x1 conv (+ fused SE gate/apply + residual) ---------

def _project_kernel(h_ref, p_ref, w1_ref, b1_ref, w2_ref, b2_ref,
                    w_ref, s_ref, b_ref, *rest, has_residual):
    if has_residual:
        r_ref, o_ref, g_ref = rest
    else:
        o_ref, g_ref = rest

    @pl.when(pl.program_id(1) == 0)
    def _():
        # tiny SE-gate MLP, computed once per image into VMEM scratch
        hsq = jnp.dot(p_ref[...], w1_ref[...],
                      preferred_element_type=jnp.float32) + b1_ref[...]
        hsq = hsq * jax.nn.sigmoid(hsq)                      # SiLU (tiny)
        g = jnp.dot(hsq, w2_ref[...],
                    preferred_element_type=jnp.float32) + b2_ref[...]
        g_ref[...] = jax.nn.sigmoid(g)

    # fused SE-apply: scale expanded activations by the per-image gate
    a = (h_ref[...].astype(jnp.float32) * g_ref[...]).astype(jnp.bfloat16)
    y = jnp.dot(a, w_ref[...], preferred_element_type=jnp.float32)
    y = y * s_ref[...] + b_ref[...]                          # folded BN (no activation)
    if has_residual:
        y = y + r_ref[...].astype(jnp.float32)               # fused residual add
    o_ref[...] = y.astype(o_ref.dtype)


def project_se_residual(h, pooled, se_params, w, scale, bias, residual=None, thw_cap=256):
    """h: (N, HW, Cexp) bf16, pooled: (N, Cexp) f32 -> (N, HW, Cout) bf16."""
    N, HW, Cexp = h.shape
    Cout = w.shape[1]
    w1, b1, w2, b2 = se_params
    Sq = w1.shape[1]
    thw = min(HW, thw_cap)
    gt = pl.cdiv(HW, thw)

    args = [h, pooled.reshape(N, 1, Cexp), w1, b1.reshape(1, Sq), w2,
            b2.reshape(1, Cexp), w, scale.reshape(1, Cout), bias.reshape(1, Cout)]
    in_specs = [
        pl.BlockSpec((None, thw, Cexp), lambda n, i: (n, i, 0)),
        pl.BlockSpec((None, 1, Cexp), lambda n, i: (n, 0, 0)),
        pl.BlockSpec((Cexp, Sq), lambda n, i: (0, 0)),
        pl.BlockSpec((1, Sq), lambda n, i: (0, 0)),
        pl.BlockSpec((Sq, Cexp), lambda n, i: (0, 0)),
        pl.BlockSpec((1, Cexp), lambda n, i: (0, 0)),
        pl.BlockSpec((Cexp, Cout), lambda n, i: (0, 0)),
        pl.BlockSpec((1, Cout), lambda n, i: (0, 0)),
        pl.BlockSpec((1, Cout), lambda n, i: (0, 0)),
    ]
    if residual is not None:
        args.append(residual)
        in_specs.append(pl.BlockSpec((None, thw, Cout), lambda n, i: (n, i, 0)))

    est = (2 * (thw * Cexp * 2 + 2 * thw * Cout * 2 + Cexp * Cout * 2
                + 2 * Cexp * Sq * 4 + 2 * Cexp * 4)
           + thw * Cexp * 4 + 2 * thw * Cout * 4)
    return pl.pallas_call(
        functools.partial(_project_kernel, has_residual=residual is not None),
        out_shape=jax.ShapeDtypeStruct((N, HW, Cout), jnp.bfloat16),
        grid=(N, gt),
        in_specs=in_specs,
        out_specs=pl.BlockSpec((None, thw, Cout), lambda n, i: (n, i, 0)),
        scratch_shapes=[pltpu.VMEM((1, Cexp), jnp.float32)],
        compiler_params=pltpu.CompilerParams(
            dimension_semantics=("parallel", "arbitrary"),   # i==0 gate init per image
            vmem_limit_bytes=_vmem_limit(est)),
    )(*args)


# ------------------------------- JAX glue ----------------------------------

def im2col(x, k, stride, pad):
    """Patch extraction for the tiny 3-channel stem only."""
    N, H, W, C = x.shape
    xp = jnp.pad(x, ((0, 0), (pad, pad), (pad, pad), (0, 0)))
    Ho = (H + 2 * pad - k) // stride + 1
    Wo = (W + 2 * pad - k) // stride + 1
    views = [xp[:, dy:dy + (Ho - 1) * stride + 1:stride,
                dx:dx + (Wo - 1) * stride + 1:stride, :]
             for dy in range(k) for dx in range(k)]
    p = jnp.stack(views, axis=3)               # (N, Ho, Wo, k*k, C)
    return p.reshape(N * Ho * Wo, k * k * C), Ho, Wo


# ------------------------ EfficientNet-B3 parameters ------------------------

class _Keys:
    def __init__(self, seed=0):
        self._k = jax.random.PRNGKey(seed)

    def __call__(self):
        self._k, sub = jax.random.split(self._k)
        return sub


def _bn_params(kg, c):
    gamma = 1.0 + 0.1 * jax.random.normal(kg(), (c,), jnp.float32)
    beta = 0.05 * jax.random.normal(kg(), (c,), jnp.float32)
    mean = 0.05 * jax.random.normal(kg(), (c,), jnp.float32)
    var = 1.0 + 0.1 * jax.random.uniform(kg(), (c,), jnp.float32)
    scale = gamma / jnp.sqrt(var + _BN_EPS)
    bias = beta - mean * scale
    return scale, bias


def _conv_w(kg, shape, fan_in):
    return jax.random.normal(kg(), shape, jnp.float32) * jnp.sqrt(2.0 / fan_in)


def _pad2(w, rows, cols):
    return jnp.pad(w, ((0, rows - w.shape[0]), (0, cols - w.shape[1])))


def _pad_bn(scale_bias, n):
    s, b = scale_bias
    return jnp.pad(s, (0, n - s.shape[0])), jnp.pad(b, (0, n - b.shape[0]))


def init_params(seed=0):
    kg = _Keys(seed)
    stem_p = _pad_c(_STEM_C)
    params = {
        "stem_w": _pad2(_conv_w(kg, (27, _STEM_C), 27), 27, stem_p).astype(jnp.bfloat16),
        "stem_bn": _pad_bn(_bn_params(kg, _STEM_C), stem_p),
        "blocks": [],
    }
    for (exp, k, stride, c_in, c_out, reps) in _B3_STAGES:
        for r in range(reps):
            cin = c_in if r == 0 else c_out
            s = stride if r == 0 else 1
            cexp = cin * exp
            sq = max(1, cin // 4)                          # torchvision SE squeeze
            cin_p, cexp_p, cout_p = _pad_c(cin), _pad_c(cexp), _pad_c(c_out)
            blk = {"exp": exp, "k": k, "stride": s,
                   "residual": (s == 1 and cin == c_out)}
            if exp != 1:
                blk["w_e"] = _pad2(_conv_w(kg, (cin, cexp), cin),
                                   cin_p, cexp_p).astype(jnp.bfloat16)
                blk["bn_e"] = _pad_bn(_bn_params(kg, cexp), cexp_p)
            blk["w_dw"] = _pad2(_conv_w(kg, (k * k, cexp), k * k), k * k, cexp_p)
            blk["bn_dw"] = _pad_bn(_bn_params(kg, cexp), cexp_p)
            blk["w1"] = _pad2(_conv_w(kg, (cexp, sq), cexp), cexp_p, sq)
            blk["b1"] = jnp.zeros((sq,), jnp.float32)
            blk["w2"] = _pad2(_conv_w(kg, (sq, cexp), sq), sq, cexp_p)
            blk["b2"] = jnp.zeros((cexp_p,), jnp.float32)
            blk["w_p"] = _pad2(_conv_w(kg, (cexp, c_out), cexp),
                               cexp_p, cout_p).astype(jnp.bfloat16)
            blk["bn_p"] = _pad_bn(_bn_params(kg, c_out), cout_p)
            params["blocks"].append(blk)
    c_last = _B3_STAGES[-1][4]                             # 384 (already 128-aligned)
    params["head_w"] = _pad2(_conv_w(kg, (c_last, _HEAD_C), c_last),
                             _pad_c(c_last), _pad_c(_HEAD_C)).astype(jnp.bfloat16)
    params["head_bn"] = _pad_bn(_bn_params(kg, _HEAD_C), _pad_c(_HEAD_C))
    return params


# ------------------------------ forward pass --------------------------------

def mbconv_forward(x, blk):
    # x: (N, H, W, Cin_pad) bf16 (padded channels are exact zeros)
    N, H, W, cin_p = x.shape
    k, stride = blk["k"], blk["stride"]
    if blk["exp"] != 1:                       # expand 1x1 conv + BN + SiLU
        s, b = blk["bn_e"]
        h = matmul_bn_act(x.reshape(N * H * W, cin_p), blk["w_e"], s, b, act="silu")
        cexp_p = h.shape[1]
        h = h.reshape(N, H, W, cexp_p)
    else:
        h, cexp_p = x, cin_p
    # depthwise kxk conv + BN + SiLU, with the SE avg-pool fused in
    s, b = blk["bn_dw"]
    h, pooled = dwconv_bn_silu_pool(h, blk["w_dw"], s, b, k=k, stride=stride)
    _, Ho, Wo, _ = h.shape
    # project 1x1 conv + BN, fused with the SE gate MLP, SE-apply and residual
    s, b = blk["bn_p"]
    res = x.reshape(N, H * W, cin_p) if blk["residual"] else None
    out = project_se_residual(h.reshape(N, Ho * Wo, cexp_p), pooled,
                              (blk["w1"], blk["b1"], blk["w2"], blk["b2"]),
                              blk["w_p"], s, b, residual=res)
    return out.reshape(N, Ho, Wo, -1)


def forward(params, x_nchw):
    # layout: NCHW in -> NHWC / bf16 internally -> NCHW f32 out.
    x = jnp.transpose(x_nchw, (0, 2, 3, 1)).astype(jnp.bfloat16)
    N = x.shape[0]
    # stem: 3x3 stride-2 conv + BN + SiLU
    a, Ho, Wo = im2col(x, 3, 2, 1)
    s, b = params["stem_bn"]
    h = matmul_bn_act(a, params["stem_w"], s, b, act="silu").reshape(N, Ho, Wo, -1)
    for blk in params["blocks"]:
        h = mbconv_forward(h, blk)
    # head: 1x1 conv + BN + SiLU  (384 -> 1536)
    Nn, H, W, C = h.shape
    s, b = params["head_bn"]
    h = matmul_bn_act(h.reshape(Nn * H * W, C), params["head_w"], s, b, act="silu")
    h = h.reshape(Nn, H, W, -1)[..., :_HEAD_C].astype(jnp.float32)
    return jnp.transpose(h, (0, 3, 1, 2))


# ---------------------------------- main ------------------------------------

if __name__ == "__main__":
    key = jax.random.PRNGKey(0)
    k1, k2, k3, k4, k5, k6, k7 = jax.random.split(key, 7)

    # --- unit check 1: ragged-M / ragged-N matmul tiling path ---
    a = jax.random.normal(k1, (300, 128), jnp.float32).astype(jnp.bfloat16)
    wm = (0.05 * jax.random.normal(k2, (128, 640), jnp.float32)).astype(jnp.bfloat16)
    sc = 1.0 + 0.1 * jax.random.normal(k3, (640,), jnp.float32)
    bi = 0.1 * jax.random.normal(k4, (640,), jnp.float32)
    got = matmul_bn_act(a, wm, sc, bi, act="silu").astype(jnp.float32)
    ref = a.astype(jnp.float32) @ wm.astype(jnp.float32) * sc + bi
    ref = ref * jax.nn.sigmoid(ref)
    assert bool(jnp.allclose(got, ref, rtol=2e-2, atol=2e-2))

    # --- unit check 2: spatially-tiled (ragged, masked-pool) dwconv path ---
    xt = jax.random.normal(k5, (2, 32, 32, 128), jnp.float32).astype(jnp.bfloat16)
    wd = 0.1 * jax.random.normal(k6, (9, 128), jnp.float32)
    sd = 1.0 + 0.1 * jax.random.normal(k7, (128,), jnp.float32)
    bd = jnp.zeros((128,), jnp.float32)
    o_big, p_big = dwconv_bn_silu_pool(xt, wd, sd, bd, k=3, stride=1)
    o_til, p_til = dwconv_bn_silu_pool(xt, wd, sd, bd, k=3, stride=1,
                                       row_budget=1 << 20)     # forces T>1 + ragged tile
    assert o_til.shape == o_big.shape
    assert bool(jnp.allclose(o_big.astype(jnp.float32), o_til.astype(jnp.float32),
                             rtol=1e-2, atol=1e-2))
    assert bool(jnp.allclose(p_big, p_til, rtol=1e-3, atol=1e-3))

    # --- full backbone forward ---
    params = init_params(seed=0)
    x = jax.random.normal(jax.random.PRNGKey(0), (2, 3, 64, 64), jnp.float32)

    fwd = jax.jit(lambda inp: forward(params, inp))
    out = jax.block_until_ready(fwd(x))

    assert out.shape == (2, _HEAD_C, 2, 2), out.shape    # (N, 1536, H/32, W/32)
    assert bool(jnp.all(jnp.isfinite(out)))
    print("KERNEL_OK")
</pallas_src>

<mosaic_0001>
module attributes {stable_mosaic.version = 11 : i64} {
  func.func @_matmul_bn_act_kernel(%arg0: i32, %arg1: i32, %arg2: memref<256x128xbf16, #tpu.memory_space<vmem>>, %arg3: memref<128x512xbf16, #tpu.memory_space<vmem>>, %arg4: memref<1x512xf32, #tpu.memory_space<vmem>>, %arg5: memref<1x512xf32, #tpu.memory_space<vmem>>, %arg6: memref<256x512xbf16, #tpu.memory_space<vmem>>) attributes {dimension_semantics = [#tpu.dimension_semantics<parallel>, #tpu.dimension_semantics<parallel>], iteration_bounds = array<i64: 2, 2>, scalar_prefetch = 0 : i64, scratch_operands = 0 : i64, tpu.core_type = #tpu.core_type<tc>, window_params = [{transform_indices = @transform_0, window_bounds = array<i64: 256, 128>}, {transform_indices = @transform_1, window_bounds = array<i64: 128, 512>}, {transform_indices = @transform_2, window_bounds = array<i64: 1, 512>}, {transform_indices = @transform_3, window_bounds = array<i64: 1, 512>}, {transform_indices = @transform_4, window_bounds = array<i64: 256, 512>}]} {
    %c0 = arith.constant 0 : index
    %c0_0 = arith.constant 0 : index
    %0 = vector.load %arg2[%c0, %c0_0] : memref<256x128xbf16, #tpu.memory_space<vmem>>, vector<256x128xbf16>
    %c0_1 = arith.constant 0 : index
    %c0_2 = arith.constant 0 : index
    %1 = vector.load %arg3[%c0_1, %c0_2] : memref<128x512xbf16, #tpu.memory_space<vmem>>, vector<128x512xbf16>
    %cst = arith.constant dense<0.000000e+00> : vector<256x512xf32>
    %2 = tpu.matmul %0, %1, %cst {dimension_numbers = #tpu.dot_dimension_numbers<[1], [0], [0], [1], [0, 0, 1, 1], [], []>} : vector<256x128xbf16>, vector<128x512xbf16>, vector<256x512xf32> -> vector<256x512xf32>
    %c0_3 = arith.constant 0 : index
    %c0_4 = arith.constant 0 : index
    %3 = vector.load %arg4[%c0_3, %c0_4] : memref<1x512xf32, #tpu.memory_space<vmem>>, vector<1x512xf32>
    %4 = vector.broadcast %3 : vector<1x512xf32> to vector<256x512xf32>
    %5 = arith.mulf %2, %4 : vector<256x512xf32>
    %c0_5 = arith.constant 0 : index
    %c0_6 = arith.constant 0 : index
    %6 = vector.load %arg5[%c0_5, %c0_6] : memref<1x512xf32, #tpu.memory_space<vmem>>, vector<1x512xf32>
    %7 = vector.broadcast %6 : vector<1x512xf32> to vector<256x512xf32>
    %8 = arith.addf %5, %7 : vector<256x512xf32>
    %cst_7 = arith.constant 0.000000e+00 : f32
    %9 = vector.broadcast %cst_7 : f32 to vector<256x512xf32>
    %10 = arith.subf %9, %8 : vector<256x512xf32>
    %11 = math.exp %10 : vector<256x512xf32>
    %cst_8 = arith.constant 1.000000e+00 : f32
    %12 = vector.broadcast %cst_8 : f32 to vector<256x512xf32>
    %13 = arith.addf %12, %11 : vector<256x512xf32>
    %14 = tpu.reciprocal %13 {approx = true} : vector<256x512xf32> -> vector<256x512xf32>
    %15 = arith.mulf %8, %14 : vector<256x512xf32>
    %16 = arith.truncf %15 : vector<256x512xf32> to vector<256x512xbf16>
    %c0_9 = arith.constant 0 : index
    %c0_10 = arith.constant 0 : index
    %17 = vector.load %arg6[%c0_9, %c0_10] : memref<256x512xbf16, #tpu.memory_space<vmem>>, vector<256x512xbf16>
    tpu.vector_store %arg6[%c0_9, %c0_10], %16 {strides = array<i32>} : memref<256x512xbf16, #tpu.memory_space<vmem>>, vector<256x512xbf16>,
    return
  }
  func.func @transform_0(%arg0: i32, %arg1: i32) -> (i32, i32) {
    %c0_i32 = arith.constant 0 : i32
    %c0_i32_0 = arith.constant 0 : i32
    return %arg1, %c0_i32 : i32, i32
  }
  func.func @transform_1(%arg0: i32, %arg1: i32) -> (i32, i32) {
    %c0_i32 = arith.constant 0 : i32
    %c0_i32_0 = arith.constant 0 : i32
    return %c0_i32, %arg0 : i32, i32
  }
  func.func @transform_2(%arg0: i32, %arg1: i32) -> (i32, i32) {
    %c0_i32 = arith.constant 0 : i32
    %c0_i32_0 = arith.constant 0 : i32
    return %c0_i32, %arg0 : i32, i32
  }
  func.func @transform_3(%arg0: i32, %arg1: i32) -> (i32, i32) {
    %c0_i32 = arith.constant 0 : i32
    %c0_i32_0 = arith.constant 0 : i32
    return %c0_i32, %arg0 : i32, i32
  }
  func.func @transform_4(%arg0: i32, %arg1: i32) -> (i32, i32) {
    %c0_i32 = arith.constant 0 : i32
    return %arg1, %arg0 : i32, i32
  }
}

</mosaic_0001>

<llo_original>
// kernel: tpu_custom_call.1
$region0: #{tpu_custom_call.1}
  #allocation0 [shape = 'u32[]', space=smem, size = 0x4, offset = 0x4, fixed_abs, tag = 'smem constant byte address 0x4 - core index']
  #allocation1 [shape = 'u32[72,128]{1,0:T(1,128)}', space=vmem, size = 0x9000, scoped, tag = 'internal scratch']
  %s0 = inlined_call_operand.hbm [shape: bf16[300,128], index: 0, kind: input, shape index: {}]
  %s1 = inlined_call_operand.hbm [shape: bf16[128,640], index: 1, kind: input, shape index: {}]
  %s2 = inlined_call_operand.hbm [shape: f32[1,640], index: 2, kind: input, shape index: {}]
  %s3 = inlined_call_operand.hbm [shape: f32[1,640], index: 3, kind: input, shape index: {}]
  %s4 = inlined_call_operand.hbm [shape: bf16[300,640], index: 4, kind: output, shape index: {}]
  %s5 = sld [smem:[#allocation0]]
  $region65: #{tpu_custom_call.1} parent=0
    _
  %s7 = ssub.s32 1, %s5
  %s8 = scalar_select 0, %s7, %s5
  $region1: #{tpu_custom_call.1} parent=0
    #allocation2 [shape = 'u8[131072]{0}', space=vmem, size = 0x20000, scoped, tag = 'input window, operand 0']
    #allocation3 [shape = 's32[2]{0}', space=sflag, size = 0x8, scoped, tag = 'scoped memory for tpu_custom_call.1']
    #allocation4 [shape = 's32[2]{0}', space=sflag, size = 0x8, scoped, tag = 'scoped memory for tpu_custom_call.1']
    #allocation5 [shape = 'u8[262144]{0}', space=vmem, size = 0x40000, scoped, tag = 'input window, operand 1']
    #allocation6 [shape = 's32[2]{0}', space=sflag, size = 0x8, scoped, tag = 'scoped memory for tpu_custom_call.1']
    #allocation7 [shape = 'u8[4096]{0}', space=vmem, size = 0x1000, scoped, tag = 'input window, operand 2']
    #allocation8 [shape = 'u8[4096]{0}', space=vmem, size = 0x1000, scoped, tag = 'input window, operand 3']
    #allocation9 [shape = 's32[2]{0}', space=sflag, size = 0x8, scoped, tag = 'scoped memory for tpu_custom_call.1']
    #allocation10 [shape = 'u8[524288]{0}', space=vmem, size = 0x80000, scoped, tag = 'output window, operand 0']
    %9 = vsyncpa [#allocation3], 0
    %s10 = scalar_lea.sflag [#allocation3], 1
    %11 = vsyncpa %s10, 0
    %12 = vsyncpa [#allocation6], 0
    %s13 = scalar_lea.sflag [#allocation6], 1
    %14 = vsyncpa %s13, 0
    %15 = vsyncpa [#allocation9], 0
    %s16 = scalar_lea.sflag [#allocation9], 1
    %17 = vsyncpa %s16, 0
    %18 = vsyncpa [#allocation4], 0
    %s19 = scalar_lea.sflag [#allocation4], 1
    %20 = vsyncpa %s19, 0
    loop: start=0, step=1, limit=6
    $region2: #{tpu_custom_call.1} parent=1 // loop_pre_header
      _
    $region3: #{tpu_custom_call.1} parent=1 // loop_header
      %s22 = sphi 0, %s26
      %p23 = scmp.ge.s32.totalorder %s22, 6
      %s29 = sphi 0, %s41
      %s30 = sphi 0, %s37
      %s31 = sphi 0, %s29
      %s32 = sphi 0, %s30
      %s33 = sphi 0, %s31
      %s34 = sphi 0, %s32
      %s44 = sphi 0, %s46
      %s47 = sphi 0, %s44
      %s48 = sphi 0, %s47
      %s64 = sphi 0, %s48
      %s70 = sphi 0, %s72
      %s73 = sphi 0, %s70
      %s74 = sphi 0, %s73
      %s90 = sphi 0, %s74
      %s96 = sphi 0, %s98
      %s99 = sphi 0, %s96
      %s100 = sphi 0, %s99
      %s116 = sphi 0, %s100
      %s122 = sphi 0, %s124
      %s125 = sphi 0, %s122
      %s126 = sphi 0, %s125
      %s142 = sphi 0, %s126
      %s150 = sphi 0, %s152
      %s153 = sphi 0, %s150
      %s154 = sphi 0, %s153
      %s170 = sphi 0, %s154
    $region4: #{tpu_custom_call.1} parent=1 // loop_header_branch
      %25 = sbr.rel (%p23) target = $region8
    $region5: #{tpu_custom_call.1} parent=1 // loop_body
      %s27 = ssub.s32 %s22, 1
      %s28 = ssub.s32 %s22, 2
      %s35 = sadd.s32 1, %s30
      %p36 = scmp.ge.s32.totalorder %s35, 2
      %s37 = scalar_select %p36, 0, %s35
      %s38 = sadd.s32 1, %s29
      %s39 = scalar_select %p36, %s38, %s29
      %p40 = scmp.ge.s32.totalorder %s39, 2
      %s41 = scalar_select %p40, 0, %s39
      %s42 = ssub.s32 %s30, %s37
      %p43 = scmp.eq.s32.totalorder %s42, 0
      %s45 = sadd.s32 %s44, 1
      %s46 = scalar_select %p43, %s44, %s45
      %p49 = pneg %p43
      %p50 = scmp.eq.s32.totalorder %s22, 3
      %p51 = por %p49, %p50
      %p52 = scmp.ne.s32.totalorder %s44, %s47
      %p53 = scmp.eq.s32.totalorder %s22, 0
      %p54 = por %p52, %p53
      %p55 = scmp.ne.s32.totalorder %s44, %s47
      %p56 = scmp.eq.s32.totalorder %s27, 3
      %p57 = por %p55, %p56
      %p58 = scmp.ne.s32.totalorder %s47, %s48
      %p59 = scmp.eq.s32.totalorder %s27, 0
      %p60 = por %p58, %p59
      %p61 = scmp.ne.s32.totalorder %s47, %s48
      %p62 = scmp.eq.s32.totalorder %s28, 3
      %p63 = por %p61, %p62
      %p65 = scmp.ne.s32.totalorder %s48, %s64
      %p66 = scmp.eq.s32.totalorder %s28, 0
      %p67 = por %p65, %p66
      %s68 = ssub.s32 %s29, %s41
      %p69 = scmp.eq.s32.totalorder %s68, 0
      %s71 = sadd.s32 %s70, 1
      %s72 = scalar_select %p69, %s70, %s71
      %p75 = pneg %p69
      %p76 = scmp.eq.s32.totalorder %s22, 3
      %p77 = por %p75, %p76
      %p78 = scmp.ne.s32.totalorder %s70, %s73
      %p79 = scmp.eq.s32.totalorder %s22, 0
      %p80 = por %p78, %p79
      %p81 = scmp.ne.s32.totalorder %s70, %s73
      %p82 = scmp.eq.s32.totalorder %s27, 3
      %p83 = por %p81, %p82
      %p84 = scmp.ne.s32.totalorder %s73, %s74
      %p85 = scmp.eq.s32.totalorder %s27, 0
      %p86 = por %p84, %p85
      %p87 = scmp.ne.s32.totalorder %s73, %s74
      %p88 = scmp.eq.s32.totalorder %s28, 3
      %p89 = por %p87, %p88
      %p91 = scmp.ne.s32.totalorder %s74, %s90
      %p92 = scmp.eq.s32.totalorder %s28, 0
      %p93 = por %p91, %p92
      %s94 = ssub.s32 %s29, %s41
      %p95 = scmp.eq.s32.totalorder %s94, 0
      %s97 = sadd.s32 %s96, 1
      %s98 = scalar_select %p95, %s96, %s97
      %p101 = pneg %p95
      %p102 = scmp.eq.s32.totalorder %s22, 3
      %p103 = por %p101, %p102
      %p104 = scmp.ne.s32.totalorder %s96, %s99
      %p105 = scmp.eq.s32.totalorder %s22, 0
      %p106 = por %p104, %p105
      %p107 = scmp.ne.s32.totalorder %s96, %s99
      %p108 = scmp.eq.s32.totalorder %s27, 3
      %p109 = por %p107, %p108
      %p110 = scmp.ne.s32.totalorder %s99, %s100
      %p111 = scmp.eq.s32.totalorder %s27, 0
      %p112 = por %p110, %p111
      %p113 = scmp.ne.s32.totalorder %s99, %s100
      %p114 = scmp.eq.s32.totalorder %s28, 3
      %p115 = por %p113, %p114
      %p117 = scmp.ne.s32.totalorder %s100, %s116
      %p118 = scmp.eq.s32.totalorder %s28, 0
      %p119 = por %p117, %p118
      %s120 = ssub.s32 %s29, %s41
      %p121 = scmp.eq.s32.totalorder %s120, 0
      %s123 = sadd.s32 %s122, 1
      %s124 = scalar_select %p121, %s122, %s123
      %p127 = pneg %p121
      %p128 = scmp.eq.s32.totalorder %s22, 3
      %p129 = por %p127, %p128
      %p130 = scmp.ne.s32.totalorder %s122, %s125
      %p131 = scmp.eq.s32.totalorder %s22, 0
      %p132 = por %p130, %p131
      %p133 = scmp.ne.s32.totalorder %s122, %s125
      %p134 = scmp.eq.s32.totalorder %s27, 3
      %p135 = por %p133, %p134
      %p136 = scmp.ne.s32.totalorder %s125, %s126
      %p137 = scmp.eq.s32.totalorder %s27, 0
      %p138 = por %p136, %p137
      %p139 = scmp.ne.s32.totalorder %s125, %s126
      %p140 = scmp.eq.s32.totalorder %s28, 3
      %p141 = por %p139, %p140
      %p143 = scmp.ne.s32.totalorder %s126, %s142
      %p144 = scmp.eq.s32.totalorder %s28, 0
      %p145 = por %p143, %p144
      %s146 = ssub.s32 %s30, %s37
      %s147 = ssub.s32 %s29, %s41
      %s148 = sor.u32 %s146, %s147
      %p149 = scmp.eq.s32.totalorder %s148, 0
      %s151 = sadd.s32 %s150, 1
      %s152 = scalar_select %p149, %s150, %s151
      %p155 = pneg %p149
      %p156 = scmp.eq.s32.totalorder %s22, 3
      %p157 = por %p155, %p156
      %p158 = scmp.ne.s32.totalorder %s150, %s153
      %p159 = scmp.eq.s32.totalorder %s22, 0
      %p160 = por %p158, %p159
      %p161 = scmp.ne.s32.totalorder %s150, %s153
      %p162 = scmp.eq.s32.totalorder %s27, 3
      %p163 = por %p161, %p162
      %p164 = scmp.ne.s32.totalorder %s153, %s154
      %p165 = scmp.eq.s32.totalorder %s27, 0
      %p166 = por %p164, %p165
      %p167 = scmp.ne.s32.totalorder %s153, %s154
      %p168 = scmp.eq.s32.totalorder %s28, 3
      %p169 = por %p167, %p168
      %p171 = scmp.ne.s32.totalorder %s154, %s170
      %p172 = scmp.eq.s32.totalorder %s28, 0
      %p173 = por %p171, %p172
      %p174 = scmp.le.s32.totalorder 1, %s22
      %p175 = scmp.lt.s32.totalorder %s22, 5
      %p176 = pnand %p174, %p175
      %p177 = pneg %p176
      // Predicated region
      $region9: #{tpu_custom_call.1} parent=5 // pred_check
        _
      $region10: #{tpu_custom_call.1} parent=5 // pred_check_branch
        %179 = sbr.rel (%p176) target = $region12
      $region11: #{tpu_custom_call.1} parent=5 // pred_region
        %s180 = ssub.s32 %s22, 1
      $region12: #{tpu_custom_call.1} parent=5 // pred_fallthru
        _
      %p181 = scmp.lt.s32.totalorder %s22, 4
      // Predicated region
      $region13: #{tpu_custom_call.1} parent=5 // pred_check
        %p182 = pneg %p181
      $region14: #{tpu_custom_call.1} parent=5 // pred_check_branch
        %184 = sbr.rel (%p182) target = $region16
      $region15: #{tpu_custom_call.1} parent=5 // pred_region
        // Predicated region
        $region17: #{tpu_custom_call.1} parent=15 // pred_check
          %p185 = pneg %p54
        $region18: #{tpu_custom_call.1} parent=15 // pred_check_branch
          %187 = sbr.rel (%p185) target = $region20
        $region19: #{tpu_custom_call.1} parent=15 // pred_region
          %s188 = sand.u32 %s44, 1
          %s189 = scalar_lea.sflag [#allocation3], %s188
          %s190 = sand.u32 %s44, 1
          %s191 = smul.addr %s190, 128
          %s192 = scalar_lea.vmem [#allocation2], %s191
          %s193 = smul.u32 32, %s30
          %s194 = ssub.s32 38, %s193
          %p195 = scmp.lt.s32.totalorder %s194, 32
          %s196 = scalar_select %p195, %s194, 32
          %s197 = smul.u32 4, %s196
          %s198 = ssub.s32 128, %s197
          %s199 = sshll.u32 %s198, 4
          %200 = vsyncadd %s189, %s199
          %p201 = scmp.ne.s32.totalorder 0, %s197
          %s202 = smul.addr %s193, 4
          %s203 = scalar_lea.hbm %s0, %s202
          %s204 = smul.u32 4, %s196
          %s205 = sshll.u32 %s203, 4
          %s206 = int_to_ptr.hbm [resolvable:$true] %s205
          %s207 = sshll.u32 %s192, 4
          %s208 = int_to_ptr.vmem [resolvable:$true] %s207
          %s209 = sshll.u32 %s204, 4
          %213 = dma.hbm_to_vmem [thread:$0]  (%p201), %s206, %s209, %s208, %s189, 64, 64, 4
        $region20: #{tpu_custom_call.1} parent=15 // pred_fallthru
          _
        // Predicated region
        $region21: #{tpu_custom_call.1} parent=15 // pred_check
          %p214 = pneg %p80
        $region22: #{tpu_custom_call.1} parent=15 // pred_check_branch
          %216 = sbr.rel (%p214) target = $region24
        $region23: #{tpu_custom_call.1} parent=15 // pred_region
          %s217 = sand.u32 %s22, 1
          %s218 = scalar_lea.sflag [#allocation6], %s217
          %s219 = sand.u32 %s70, 1
          %s220 = smul.addr %s219, 256
          %s221 = scalar_lea.vmem [#allocation5], %s220
          %s222 = smul.u32 4, %s29
          %s223 = ssub.s32 5, %s222
          %p224 = scmp.lt.s32.totalorder %s223, 4
          %s225 = scalar_select %p224, %s223, 4
          %s226 = smul.u32 64, %s225
          %s227 = ssub.s32 256, %s226
          %s228 = sshll.u32 %s227, 4
          %229 = vsyncadd %s218, %s228
          %p230 = scmp.ne.s32.totalorder 0, %s226
          %s231 = smul.addr %s222, 4
          %s232 = scalar_lea.hbm %s1, %s231
          %s233 = smul.u32 %s225, 4
          %s234 = smul.u32 %s233, 16
          %s235 = sshll.u32 %s232, 4
          %s236 = int_to_ptr.hbm [resolvable:$true] %s235
          %s237 = sshll.u32 %s221, 4
          %s238 = int_to_ptr.vmem [resolvable:$true] %s237
          %s239 = sshll.u32 %s234, 4
          %243 = dma.hbm_to_vmem [thread:$0]  (%p230), %s236, %s239, %s238, %s218, 320, 256, %s233
        $region24: #{tpu_custom_call.1} parent=15 // pred_fallthru
          _
        // Predicated region
        $region25: #{tpu_custom_call.1} parent=15 // pred_check
          %p244 = pneg %p106
        $region26: #{tpu_custom_call.1} parent=15 // pred_check_branch
          %246 = sbr.rel (%p244) target = $region28
        $region27: #{tpu_custom_call.1} parent=15 // pred_region
          %s247 = sand.u32 %s22, 1
          %s248 = scalar_lea.sflag [#allocation6], %s247
          %s249 = sand.u32 %s96, 1
          %s250 = smul.addr %s249, 4
          %s251 = scalar_lea.vmem [#allocation7], %s250
          %s252 = smul.u32 4, %s29
          %s253 = ssub.s32 5, %s252
          %p254 = scmp.lt.s32.totalorder %s253, 4
          %s255 = scalar_select %p254, %s253, 4
          %s256 = ssub.s32 4, %s255
          %s257 = sshll.u32 %s256, 4
          %258 = vsyncadd %s248, %s257
          %p259 = scmp.ne.s32.totalorder 0, %s255
          %s260 = scalar_lea.hbm %s2, %s252
          %s261 = sshll.u32 %s255, 4
          %s262 = sshll.u32 %s260, 4
          %s263 = int_to_ptr.hbm [resolvable:$true] %s262
          %s264 = sshll.u32 %s251, 4
          %s265 = int_to_ptr.vmem [resolvable:$true] %s264
          %267 = dma.hbm_to_vmem [thread:$0]  (%p259), %s263, %s261, %s265, %s248
        $region28: #{tpu_custom_call.1} parent=15 // pred_fallthru
          _
        // Predicated region
        $region29: #{tpu_custom_call.1} parent=15 // pred_check
          %p268 = pneg %p132
        $region30: #{tpu_custom_call.1} parent=15 // pred_check_branch
          %270 = sbr.rel (%p268) target = $region32
        $region31: #{tpu_custom_call.1} parent=15 // pred_region
          %s271 = sand.u32 %s122, 1
          %s272 = scalar_lea.sflag [#allocation9], %s271
          %s273 = sand.u32 %s122, 1
          %s274 = smul.addr %s273, 4
          %s275 = scalar_lea.vmem [#allocation8], %s274
          %s276 = smul.u32 4, %s29
          %s277 = ssub.s32 5, %s276
          %p278 = scmp.lt.s32.totalorder %s277, 4
          %s279 = scalar_select %p278, %s277, 4
          %s280 = ssub.s32 4, %s279
          %s281 = sshll.u32 %s280, 4
          %282 = vsyncadd %s272, %s281
          %p283 = scmp.ne.s32.totalorder 0, %s279
          %s284 = scalar_lea.hbm %s3, %s276
          %s285 = sshll.u32 %s279, 4
          %s286 = sshll.u32 %s284, 4
          %s287 = int_to_ptr.hbm [resolvable:$true] %s286
          %s288 = sshll.u32 %s275, 4
          %s289 = int_to_ptr.vmem [resolvable:$true] %s288
          %291 = dma.hbm_to_vmem [thread:$0]  (%p283), %s287, %s285, %s289, %s272
        $region32: #{tpu_custom_call.1} parent=15 // pred_fallthru
          _
      $region16: #{tpu_custom_call.1} parent=5 // pred_fallthru
        _
      %p292 = scmp.le.s32.totalorder 1, %s22
      %p293 = scmp.lt.s32.totalorder %s22, 5
      %p294 = pnand %p292, %p293
      %p295 = pneg %p294
      // Predicated region
      $region33: #{tpu_custom_call.1} parent=5 // pred_check
        _
      $region34: #{tpu_custom_call.1} parent=5 // pred_check_branch
        %297 = sbr.rel (%p294) target = $region36
      $region35: #{tpu_custom_call.1} parent=5 // pred_region
        %s298 = ssub.s32 %s22, 1
        %s299 = sand.u32 %s47, 1
        %s300 = scalar_lea.sflag [#allocation3], %s299
        %s301 = sand.u32 %s47, 1
        %s302 = smul.addr %s301, 128
        %s303 = scalar_lea.vmem [#allocation2], %s302
        // Predicated region
        $region37: #{tpu_custom_call.1} parent=35 // pred_check
          %p304 = pneg %p60
        $region38: #{tpu_custom_call.1} parent=35 // pred_check_branch
          %306 = sbr.rel (%p304) target = $region40
        $region39: #{tpu_custom_call.1} parent=35 // pred_region
          %308 = dma.done %s300, 2048
        $region40: #{tpu_custom_call.1} parent=35 // pred_fallthru
          _
        %s309 = sand.u32 %s27, 1
        %s310 = scalar_lea.sflag [#allocation6], %s309
        %s311 = sand.u32 %s73, 1
        %s312 = smul.addr %s311, 256
        %s313 = scalar_lea.vmem [#allocation5], %s312
        // Predicated region
        $region41: #{tpu_custom_call.1} parent=35 // pred_check
          %p314 = pneg %p86
        $region42: #{tpu_custom_call.1} parent=35 // pred_check_branch
          %316 = sbr.rel (%p314) target = $region44
        $region43: #{tpu_custom_call.1} parent=35 // pred_region
          %318 = dma.done %s310, 4096
        $region44: #{tpu_custom_call.1} parent=35 // pred_fallthru
          _
        %s319 = sand.u32 %s27, 1
        %s320 = scalar_lea.sflag [#allocation6], %s319
        %s321 = sand.u32 %s99, 1
        %s322 = smul.addr %s321, 4
        %s323 = scalar_lea.vmem [#allocation7], %s322
        // Predicated region
        $region45: #{tpu_custom_call.1} parent=35 // pred_check
          %p324 = pneg %p112
        $region46: #{tpu_custom_call.1} parent=35 // pred_check_branch
          %326 = sbr.rel (%p324) target = $region48
        $region47: #{tpu_custom_call.1} parent=35 // pred_region
          %328 = dma.done %s320, 64
        $region48: #{tpu_custom_call.1} parent=35 // pred_fallthru
          _
        %s329 = sand.u32 %s125, 1
        %s330 = scalar_lea.sflag [#allocation9], %s329
        %s331 = sand.u32 %s125, 1
        %s332 = smul.addr %s331, 4
        %s333 = scalar_lea.vmem [#allocation8], %s332
        // Predicated region
        $region49: #{tpu_custom_call.1} parent=35 // pred_check
          %p334 = pneg %p138
        $region50: #{tpu_custom_call.1} parent=35 // pred_check_branch
          %336 = sbr.rel (%p334) target = $region52
        $region51: #{tpu_custom_call.1} parent=35 // pred_region
          %338 = dma.done %s330, 64
        $region52: #{tpu_custom_call.1} parent=35 // pred_fallthru
          _
        %s339 = sand.u32 %s47, 1
        %s340 = scalar_lea.sflag [#allocation3], %s339
        %s341 = sand.u32 %s47, 1
        %s342 = smul.addr %s341, 128
        %s343 = scalar_lea.vmem [#allocation2], %s342
        %p344 = pneg %p60
        %p345 = pneg %p57
        %s346 = sand.u32 %s27, 1
        %s347 = scalar_lea.sflag [#allocation6], %s346
        %s348 = sand.u32 %s73, 1
        %s349 = smul.addr %s348, 256
        %s350 = scalar_lea.vmem [#allocation5], %s349
        %p351 = pneg %p86
        %p352 = pneg %p83
        %s353 = sand.u32 %s27, 1
        %s354 = scalar_lea.sflag [#allocation6], %s353
        %s355 = sand.u32 %s99, 1
        %s356 = smul.addr %s355, 4
        %s357 = scalar_lea.vmem [#allocation7], %s356
        %p358 = pneg %p112
        %p359 = pneg %p109
        %s360 = sand.u32 %s125, 1
        %s361 = scalar_lea.sflag [#allocation9], %s360
        %s362 = sand.u32 %s125, 1
        %s363 = smul.addr %s362, 4
        %s364 = scalar_lea.vmem [#allocation8], %s363
        %p365 = pneg %p138
        %p366 = pneg %p135
        %p367 = pneg %p166
        %p368 = pneg %p163
        %s369 = sand.u32 %s153, 1
        %s370 = scalar_lea.sflag [#allocation4], %s369
        %s371 = sand.u32 %s153, 1
        %s372 = smul.addr %s371, 512
        %s373 = scalar_lea.vmem [#allocation10], %s372
        %s374 = smul.u32 32, %s32
        %s375 = ssub.s32 38, %s374
        %p376 = scmp.lt.s32.totalorder %s375, 32
        %s377 = scalar_select %p376, %s375, 32
        %s378 = smul.u32 4, %s377
        %s379 = smul.u32 4, %s31
        %s380 = ssub.s32 5, %s379
        %p381 = scmp.lt.s32.totalorder %s380, 4
        %s382 = scalar_select %p381, %s380, 4
        %s383 = smul.u32 64, %s382
        %s384 = smul.u32 4, %s31
        %s385 = ssub.s32 5, %s384
        %p386 = scmp.lt.s32.totalorder %s385, 4
        %s387 = scalar_select %p386, %s385, 4
        %s388 = smul.u32 4, %s31
        %s389 = ssub.s32 5, %s388
        %p390 = scmp.lt.s32.totalorder %s389, 4
        %s391 = scalar_select %p390, %s389, 4
        %s392 = smul.u32 32, %s32
        %s393 = smul.u32 4, %s31
        %s394 = ssub.s32 38, %s392
        %p395 = scmp.lt.s32.totalorder %s394, 32
        %s396 = scalar_select %p395, %s394, 32
        %s397 = smul.u32 4, %s396
        %s398 = ssub.s32 5, %s393
        %p399 = scmp.lt.s32.totalorder %s398, 4
        %s400 = scalar_select %p399, %s398, 4
        %s401 = smul.u32 %s397, %s400
        %v402 = vld [vmem:[%s303] sm:$0xf]
        %v403 = vld [vmem:[%s303 + $0x4] sm:$0xf]
        %v404 = vld [vmem:[%s303 + $0x8] sm:$0xf]
        %v405 = vld [vmem:[%s303 + $0xc] sm:$0xf]
        %v406 = vld [vmem:[%s303 + $0x10] sm:$0xf]
        %v407 = vld [vmem:[%s303 + $0x14] sm:$0xf]
        %v408 = vld [vmem:[%s303 + $0x18] sm:$0xf]
        %v409 = vld [vmem:[%s303 + $0x1c] sm:$0xf]
        %v410 = vld [vmem:[%s303 + $0x20] sm:$0xf]
        %v411 = vld [vmem:[%s303 + $0x24] sm:$0xf]
        %v412 = vld [vmem:[%s303 + $0x28] sm:$0xf]
        %v413 = vld [vmem:[%s303 + $0x2c] sm:$0xf]
        %v414 = vld [vmem:[%s303 + $0x30] sm:$0xf]
        %v415 = vld [vmem:[%s303 + $0x34] sm:$0xf]
        %v416 = vld [vmem:[%s303 + $0x38] sm:$0xf]
        %v417 = vld [vmem:[%s303 + $0x3c] sm:$0xf]
        %v418 = vld [vmem:[%s303 + $0x40] sm:$0xf]
        %v419 = vld [vmem:[%s303 + $0x44] sm:$0xf]
        %v420 = vld [vmem:[%s303 + $0x48] sm:$0xf]
        %v421 = vld [vmem:[%s303 + $0x4c] sm:$0xf]
        %v422 = vld [vmem:[%s303 + $0x50] sm:$0xf]
        %v423 = vld [vmem:[%s303 + $0x54] sm:$0xf]
        %v424 = vld [vmem:[%s303 + $0x58] sm:$0xf]
        %v425 = vld [vmem:[%s303 + $0x5c] sm:$0xf]
        %v426 = vld [vmem:[%s303 + $0x60] sm:$0xf]
        %v427 = vld [vmem:[%s303 + $0x64] sm:$0xf]
        %v428 = vld [vmem:[%s303 + $0x68] sm:$0xf]
        %v429 = vld [vmem:[%s303 + $0x6c] sm:$0xf]
        %v430 = vld [vmem:[%s303 + $0x70] sm:$0xf]
        %v431 = vld [vmem:[%s303 + $0x74] sm:$0xf]
        %v432 = vld [vmem:[%s303 + $0x78] sm:$0xf]
        %v433 = vld [vmem:[%s303 + $0x7c] sm:$0xf]
        %v434 = vld [vmem:[%s313] sm:$0xff]
        %v435 = vld [vmem:[%s313 + $0x8] sm:$0xff]
        %v436 = vld [vmem:[%s313 + $0x10] sm:$0xff]
        %v437 = vld [vmem:[%s313 + $0x18] sm:$0xff]
        %v438 = vld [vmem:[%s313 + $0x20] sm:$0xff]
        %v439 = vld [vmem:[%s313 + $0x28] sm:$0xff]
        %v440 = vld [vmem:[%s313 + $0x30] sm:$0xff]
        %v441 = vld [vmem:[%s313 + $0x38] sm:$0xff]
        %v442 = vld [vmem:[%s313 + $0x40] sm:$0xff]
        %v443 = vld [vmem:[%s313 + $0x48] sm:$0xff]
        %v444 = vld [vmem:[%s313 + $0x50] sm:$0xff]
        %v445 = vld [vmem:[%s313 + $0x58] sm:$0xff]
        %v446 = vld [vmem:[%s313 + $0x60] sm:$0xff]
        %v447 = vld [vmem:[%s313 + $0x68] sm:$0xff]
        %v448 = vld [vmem:[%s313 + $0x70] sm:$0xff]
        %v449 = vld [vmem:[%s313 + $0x78] sm:$0xff]
        %v450 = vld [vmem:[%s313 + $0x80] sm:$0xff]
        %v451 = vld [vmem:[%s313 + $0x88] sm:$0xff]
        %v452 = vld [vmem:[%s313 + $0x90] sm:$0xff]
        %v453 = vld [vmem:[%s313 + $0x98] sm:$0xff]
        %v454 = vld [vmem:[%s313 + $0xa0] sm:$0xff]
        %v455 = vld [vmem:[%s313 + $0xa8] sm:$0xff]
        %v456 = vld [vmem:[%s313 + $0xb0] sm:$0xff]
        %v457 = vld [vmem:[%s313 + $0xb8] sm:$0xff]
        %v458 = vld [vmem:[%s313 + $0xc0] sm:$0xff]
        %v459 = vld [vmem:[%s313 + $0xc8] sm:$0xff]
        %v460 = vld [vmem:[%s313 + $0xd0] sm:$0xff]
        %v461 = vld [vmem:[%s313 + $0xd8] sm:$0xff]
        %v462 = vld [vmem:[%s313 + $0xe0] sm:$0xff]
        %v463 = vld [vmem:[%s313 + $0xe8] sm:$0xff]
        %v464 = vld [vmem:[%s313 + $0xf0] sm:$0xff]
        %v465 = vld [vmem:[%s313 + $0xf8] sm:$0xff]
        %v498 = vunpack.c.l.b16 %v402
        %v499 = vunpack.c.l.b16 %v403
        %v500 = vunpack.c.l.b16 %v404
        %v501 = vunpack.c.l.b16 %v405
        %v502 = vunpack.c.l.b16 %v406
        %v503 = vunpack.c.l.b16 %v407
        %v504 = vunpack.c.l.b16 %v408
        %v505 = vunpack.c.l.b16 %v409
        %v506 = vunpack.c.l.b16 %v410
        %v507 = vunpack.c.l.b16 %v411
        %v508 = vunpack.c.l.b16 %v412
        %v509 = vunpack.c.l.b16 %v413
        %v510 = vunpack.c.l.b16 %v414
        %v511 = vunpack.c.l.b16 %v415
        %v512 = vunpack.c.l.b16 %v416
        %v513 = vunpack.c.l.b16 %v417
        %v514 = vunpack.c.l.b16 %v418
        %v515 = vunpack.c.l.b16 %v419
        %v516 = vunpack.c.l.b16 %v420
        %v517 = vunpack.c.l.b16 %v421
        %v518 = vunpack.c.l.b16 %v422
        %v519 = vunpack.c.l.b16 %v423
        %v520 = vunpack.c.l.b16 %v424
        %v521 = vunpack.c.l.b16 %v425
        %v522 = vunpack.c.l.b16 %v426
        %v523 = vunpack.c.l.b16 %v427
        %v524 = vunpack.c.l.b16 %v428
        %v525 = vunpack.c.l.b16 %v429
        %v526 = vunpack.c.l.b16 %v430
        %v527 = vunpack.c.l.b16 %v431
        %v528 = vunpack.c.l.b16 %v432
        %v529 = vunpack.c.l.b16 %v433
        %v530 = vpack.c.b16 %v499, %v498
        %v531 = vpack.c.b16 %v501, %v500
        %v532 = vpack.c.b16 %v503, %v502
        %v533 = vpack.c.b16 %v505, %v504
        %v534 = vpack.c.b16 %v507, %v506
        %v535 = vpack.c.b16 %v509, %v508
        %v536 = vpack.c.b16 %v511, %v510
        %v537 = vpack.c.b16 %v513, %v512
        %v538 = vpack.c.b16 %v515, %v514
        %v539 = vpack.c.b16 %v517, %v516
        %v540 = vpack.c.b16 %v519, %v518
        %v541 = vpack.c.b16 %v521, %v520
        %v542 = vpack.c.b16 %v523, %v522
        %v543 = vpack.c.b16 %v525, %v524
        %v544 = vpack.c.b16 %v527, %v526
        %v545 = vpack.c.b16 %v529, %v528
        %v594 = vunpack.c.l.b16 %v434
        %v595 = vunpack.c.h.b16 %v434
        %v596 = vunpack.c.l.b16 %v435
        %v597 = vunpack.c.h.b16 %v435
        %v598 = vunpack.c.l.b16 %v436
        %v599 = vunpack.c.h.b16 %v436
        %v600 = vunpack.c.l.b16 %v437
        %v601 = vunpack.c.h.b16 %v437
        %v602 = vunpack.c.l.b16 %v438
        %v603 = vunpack.c.h.b16 %v438
        %v604 = vunpack.c.l.b16 %v439
        %v605 = vunpack.c.h.b16 %v439
        %v606 = vunpack.c.l.b16 %v440
        %v607 = vunpack.c.h.b16 %v440
        %v608 = vunpack.c.l.b16 %v441
        %v609 = vunpack.c.h.b16 %v441
        %v610 = vunpack.c.l.b16 %v442
        %v611 = vunpack.c.h.b16 %v442
        %v612 = vunpack.c.l.b16 %v443
        %v613 = vunpack.c.h.b16 %v443
        %v614 = vunpack.c.l.b16 %v444
        %v615 = vunpack.c.h.b16 %v444
        %v616 = vunpack.c.l.b16 %v445
        %v617 = vunpack.c.h.b16 %v445
        %v618 = vunpack.c.l.b16 %v446
        %v619 = vunpack.c.h.b16 %v446
        %v620 = vunpack.c.l.b16 %v447
        %v621 = vunpack.c.h.b16 %v447
        %v622 = vunpack.c.l.b16 %v448
        %v623 = vunpack.c.h.b16 %v448
        %v624 = vunpack.c.l.b16 %v449
        %v625 = vunpack.c.h.b16 %v449
        %v626 = vunpack.c.l.b16 %v450
        %v627 = vunpack.c.h.b16 %v450
        %v628 = vunpack.c.l.b16 %v451
        %v629 = vunpack.c.h.b16 %v451
        %v630 = vunpack.c.l.b16 %v452
        %v631 = vunpack.c.h.b16 %v452
        %v632 = vunpack.c.l.b16 %v453
        %v633 = vunpack.c.h.b16 %v453
        %v634 = vunpack.c.l.b16 %v454
        %v635 = vunpack.c.h.b16 %v454
        %v636 = vunpack.c.l.b16 %v455
        %v637 = vunpack.c.h.b16 %v455
        %v638 = vunpack.c.l.b16 %v456
        %v639 = vunpack.c.h.b16 %v456
        %v640 = vunpack.c.l.b16 %v457
        %v641 = vunpack.c.h.b16 %v457
        %v642 = vunpack.c.l.b16 %v458
        %v643 = vunpack.c.h.b16 %v458
        %v644 = vunpack.c.l.b16 %v459
        %v645 = vunpack.c.h.b16 %v459
        %v646 = vunpack.c.l.b16 %v460
        %v647 = vunpack.c.h.b16 %v460
        %v648 = vunpack.c.l.b16 %v461
        %v649 = vunpack.c.h.b16 %v461
        %v650 = vunpack.c.l.b16 %v462
        %v651 = vunpack.c.h.b16 %v462
        %v652 = vunpack.c.l.b16 %v463
        %v653 = vunpack.c.h.b16 %v463
        %v654 = vunpack.c.l.b16 %v464
        %v655 = vunpack.c.h.b16 %v464
        %v656 = vunpack.c.l.b16 %v465
        %v657 = vunpack.c.h.b16 %v465
        %v658 = vpack.c.b16 %v598, %v594
        %v659 = vpack.c.b16 %v599, %v595
        %v660 = vpack.c.b16 %v600, %v596
        %v661 = vpack.c.b16 %v601, %v597
        %v662 = vpack.c.b16 %v606, %v602
        %v663 = vpack.c.b16 %v607, %v603
        %v664 = vpack.c.b16 %v608, %v604
        %v665 = vpack.c.b16 %v609, %v605
        %v666 = vpack.c.b16 %v614, %v610
        %v667 = vpack.c.b16 %v615, %v611
        %v668 = vpack.c.b16 %v616, %v612
        %v669 = vpack.c.b16 %v617, %v613
        %v670 = vpack.c.b16 %v622, %v618
        %v671 = vpack.c.b16 %v623, %v619
        %v672 = vpack.c.b16 %v624, %v620
        %v673 = vpack.c.b16 %v625, %v621
        %v674 = vpack.c.b16 %v630, %v626
        %v675 = vpack.c.b16 %v631, %v627
        %v676 = vpack.c.b16 %v632, %v628
        %v677 = vpack.c.b16 %v633, %v629
        %v678 = vpack.c.b16 %v638, %v634
        %v679 = vpack.c.b16 %v639, %v635
        %v680 = vpack.c.b16 %v640, %v636
        %v681 = vpack.c.b16 %v641, %v637
        %v682 = vpack.c.b16 %v646, %v642
        %v683 = vpack.c.b16 %v647, %v643
        %v684 = vpack.c.b16 %v648, %v644
        %v685 = vpack.c.b16 %v649, %v645
        %v686 = vpack.c.b16 %v654, %v650
        %v687 = vpack.c.b16 %v655, %v651
        %v688 = vpack.c.b16 %v656, %v652
        %v689 = vpack.c.b16 %v657, %v653
        %722 = vmatpush.bf16.msra.mxu0 %v686
        %723 = vmatpush.bf16.msra.mxu0 %v682
        %724 = vmatpush.bf16.msra.mxu0 %v678
        %725 = vmatpush.bf16.msra.mxu0 %v674
        %726 = vmatpush.bf16.msra.mxu0 %v670
        %727 = vmatpush.bf16.msra.mxu0 %v666
        %728 = vmatpush.bf16.msra.mxu0 %v662
        %729 = vmatpush.bf16.msra.mxu0 %v658
        %730 = vmatmul.bf16.gmra.mxu0 %v530
        %v731 = vpop.f32.mrf.mxu0
        %v732 = vadd.f32 0.0, %v731
        %v733 = vpop.f32.mrf.mxu0
        %v734 = vadd.f32 0.0, %v733
        %735 = vmatmul.bf16.gmra.mxu0 %v531
        %v736 = vpop.f32.mrf.mxu0
        %v737 = vadd.f32 0.0, %v736
        %v738 = vpop.f32.mrf.mxu0
        %v739 = vadd.f32 0.0, %v738
        %740 = vmatmul.bf16.gmra.mxu0 %v532
        %v741 = vpop.f32.mrf.mxu0
        %v742 = vadd.f32 0.0, %v741
        %v743 = vpop.f32.mrf.mxu0
        %v744 = vadd.f32 0.0, %v743
        %745 = vmatmul.bf16.gmra.mxu0 %v533
        %v746 = vpop.f32.mrf.mxu0
        %v747 = vadd.f32 0.0, %v746
        %v748 = vpop.f32.mrf.mxu0
        %v749 = vadd.f32 0.0, %v748
        %750 = vmatmul.bf16.gmra.mxu0 %v534
        %v751 = vpop.f32.mrf.mxu0
        %v752 = vadd.f32 0.0, %v751
        %v753 = vpop.f32.mrf.mxu0
        %v754 = vadd.f32 0.0, %v753
        %755 = vmatmul.bf16.gmra.mxu0 %v535
        %v756 = vpop.f32.mrf.mxu0
        %v757 = vadd.f32 0.0, %v756
        %v758 = vpop.f32.mrf.mxu0
        %v759 = vadd.f32 0.0, %v758
        %760 = vmatmul.bf16.gmra.mxu0 %v536
        %v761 = vpop.f32.mrf.mxu0
        %v762 = vadd.f32 0.0, %v761
        %v763 = vpop.f32.mrf.mxu0
        %v764 = vadd.f32 0.0, %v763
        %765 = vmatmul.bf16.gmra.mxu0 %v537
        %v766 = vpop.f32.mrf.mxu0
        %v767 = vadd.f32 0.0, %v766
        %v768 = vpop.f32.mrf.mxu0
        %v769 = vadd.f32 0.0, %v768
        %770 = vmatmul.bf16.gmra.mxu0 %v538
        %v771 = vpop.f32.mrf.mxu0
        %v772 = vadd.f32 0.0, %v771
        %v773 = vpop.f32.mrf.mxu0
        %v774 = vadd.f32 0.0, %v773
        %775 = vmatmul.bf16.gmra.mxu0 %v539
        %v776 = vpop.f32.mrf.mxu0
        %v777 = vadd.f32 0.0, %v776
        %v778 = vpop.f32.mrf.mxu0
        %v779 = vadd.f32 0.0, %v778
        %780 = vmatmul.bf16.gmra.mxu0 %v540
        %v781 = vpop.f32.mrf.mxu0
        %v782 = vadd.f32 0.0, %v781
        %v783 = vpop.f32.mrf.mxu0
        %v784 = vadd.f32 0.0, %v783
        %785 = vmatmul.bf16.gmra.mxu0 %v541
        %v786 = vpop.f32.mrf.mxu0
        %v787 = vadd.f32 0.0, %v786
        %v788 = vpop.f32.mrf.mxu0
        %v789 = vadd.f32 0.0, %v788
        %790 = vmatmul.bf16.gmra.mxu0 %v542
        %v791 = vpop.f32.mrf.mxu0
        %v792 = vadd.f32 0.0, %v791
        %v793 = vpop.f32.mrf.mxu0
        %v794 = vadd.f32 0.0, %v793
        %795 = vmatmul.bf16.gmra.mxu0 %v543
        %v796 = vpop.f32.mrf.mxu0
        %v797 = vadd.f32 0.0, %v796
        %v798 = vpop.f32.mrf.mxu0
        %v799 = vadd.f32 0.0, %v798
        %800 = vmatmul.bf16.gmra.mxu0 %v544
        %v801 = vpop.f32.mrf.mxu0
        %v802 = vadd.f32 0.0, %v801
        %v803 = vpop.f32.mrf.mxu0
        %v804 = vadd.f32 0.0, %v803
        %805 = vmatmul.bf16.gmra.mxu0 %v545
        %v806 = vpop.f32.mrf.mxu0
        %v807 = vadd.f32 0.0, %v806
        %v808 = vpop.f32.mrf.mxu0
        %v809 = vadd.f32 0.0, %v808
        %810 = vdwg.mxu0
        %811 = vmatpush.bf16.msra.mxu0 %v687
        %812 = vmatpush.bf16.msra.mxu0 %v683
        %813 = vmatpush.bf16.msra.mxu0 %v679
        %814 = vmatpush.bf16.msra.mxu0 %v675
        %815 = vmatpush.bf16.msra.mxu0 %v671
        %816 = vmatpush.bf16.msra.mxu0 %v667
        %817 = vmatpush.bf16.msra.mxu0 %v663
        %818 = vmatpush.bf16.msra.mxu0 %v659
        %819 = vmatmul.bf16.gmra.mxu0 %v530
        %v820 = vpop.f32.mrf.mxu0
        %v821 = vadd.f32 0.0, %v820
        %v822 = vpop.f32.mrf.mxu0
        %v823 = vadd.f32 0.0, %v822
        %824 = vmatmul.bf16.gmra.mxu0 %v531
        %v825 = vpop.f32.mrf.mxu0
        %v826 = vadd.f32 0.0, %v825
        %v827 = vpop.f32.mrf.mxu0
        %v828 = vadd.f32 0.0, %v827
        %829 = vmatmul.bf16.gmra.mxu0 %v532
        %v830 = vpop.f32.mrf.mxu0
        %v831 = vadd.f32 0.0, %v830
        %v832 = vpop.f32.mrf.mxu0
        %v833 = vadd.f32 0.0, %v832
        %834 = vmatmul.bf16.gmra.mxu0 %v533
        %v835 = vpop.f32.mrf.mxu0
        %v836 = vadd.f32 0.0, %v835
        %v837 = vpop.f32.mrf.mxu0
        %v838 = vadd.f32 0.0, %v837
        %839 = vmatmul.bf16.gmra.mxu0 %v534
        %v840 = vpop.f32.mrf.mxu0
        %v841 = vadd.f32 0.0, %v840
        %v842 = vpop.f32.mrf.mxu0
        %v843 = vadd.f32 0.0, %v842
        %844 = vmatmul.bf16.gmra.mxu0 %v535
        %v845 = vpop.f32.mrf.mxu0
        %v846 = vadd.f32 0.0, %v845
        %v847 = vpop.f32.mrf.mxu0
        %v848 = vadd.f32 0.0, %v847
        %849 = vmatmul.bf16.gmra.mxu0 %v536
        %v850 = vpop.f32.mrf.mxu0
        %v851 = vadd.f32 0.0, %v850
        %v852 = vpop.f32.mrf.mxu0
        %v853 = vadd.f32 0.0, %v852
        %854 = vmatmul.bf16.gmra.mxu0 %v537
        %v855 = vpop.f32.mrf.mxu0
        %v856 = vadd.f32 0.0, %v855
        %v857 = vpop.f32.mrf.mxu0
        %v858 = vadd.f32 0.0, %v857
        %859 = vmatmul.bf16.gmra.mxu0 %v538
        %v860 = vpop.f32.mrf.mxu0
        %v861 = vadd.f32 0.0, %v860
        %v862 = vpop.f32.mrf.mxu0
        %v863 = vadd.f32 0.0, %v862
        %864 = vmatmul.bf16.gmra.mxu0 %v539
        %v865 = vpop.f32.mrf.mxu0
        %v866 = vadd.f32 0.0, %v865
        %v867 = vpop.f32.mrf.mxu0
        %v868 = vadd.f32 0.0, %v867
        %869 = vmatmul.bf16.gmra.mxu0 %v540
        %v870 = vpop.f32.mrf.mxu0
        %v871 = vadd.f32 0.0, %v870
        %v872 = vpop.f32.mrf.mxu0
        %v873 = vadd.f32 0.0, %v872
        %874 = vmatmul.bf16.gmra.mxu0 %v541
        %v875 = vpop.f32.mrf.mxu0
        %v876 = vadd.f32 0.0, %v875
        %v877 = vpop.f32.mrf.mxu0
        %v878 = vadd.f32 0.0, %v877
        %879 = vmatmul.bf16.gmra.mxu0 %v542
        %v880 = vpop.f32.mrf.mxu0
        %v881 = vadd.f32 0.0, %v880
        %v882 = vpop.f32.mrf.mxu0
        %v883 = vadd.f32 0.0, %v882
        %884 = vmatmul.bf16.gmra.mxu0 %v543
        %v885 = vpop.f32.mrf.mxu0
        %v886 = vadd.f32 0.0, %v885
        %v887 = vpop.f32.mrf.mxu0
        %v888 = vadd.f32 0.0, %v887
        %889 = vmatmul.bf16.gmra.mxu0 %v544
        %v890 = vpop.f32.mrf.mxu0
        %v891 = vadd.f32 0.0, %v890
        %v892 = vpop.f32.mrf.mxu0
        %v893 = vadd.f32 0.0, %v892
        %894 = vmatmul.bf16.gmra.mxu0 %v545
        %v895 = vpop.f32.mrf.mxu0
        %v896 = vadd.f32 0.0, %v895
        %v897 = vpop.f32.mrf.mxu0
        %v898 = vadd.f32 0.0, %v897
        %899 = vdwg.mxu0
        %900 = vmatpush.bf16.msra.mxu0 %v688
        %901 = vmatpush.bf16.msra.mxu0 %v684
        %902 = vmatpush.bf16.msra.mxu0 %v680
        %903 = vmatpush.bf16.msra.mxu0 %v676
        %904 = vmatpush.bf16.msra.mxu0 %v672
        %905 = vmatpush.bf16.msra.mxu0 %v668
        %906 = vmatpush.bf16.msra.mxu0 %v664
        %907 = vmatpush.bf16.msra.mxu0 %v660
        %908 = vmatmul.bf16.gmra.mxu0 %v530
        %v909 = vpop.f32.mrf.mxu0
        %v910 = vadd.f32 0.0, %v909
        %v911 = vpop.f32.mrf.mxu0
        %v912 = vadd.f32 0.0, %v911
        %913 = vmatmul.bf16.gmra.mxu0 %v531
        %v914 = vpop.f32.mrf.mxu0
        %v915 = vadd.f32 0.0, %v914
        %v916 = vpop.f32.mrf.mxu0
        %v917 = vadd.f32 0.0, %v916
        %918 = vmatmul.bf16.gmra.mxu0 %v532
        %v919 = vpop.f32.mrf.mxu0
        %v920 = vadd.f32 0.0, %v919
        %v921 = vpop.f32.mrf.mxu0
        %v922 = vadd.f32 0.0, %v921
        %923 = vmatmul.bf16.gmra.mxu0 %v533
        %v924 = vpop.f32.mrf.mxu0
        %v925 = vadd.f32 0.0, %v924
        %v926 = vpop.f32.mrf.mxu0
        %v927 = vadd.f32 0.0, %v926
        %928 = vmatmul.bf16.gmra.mxu0 %v534
        %v929 = vpop.f32.mrf.mxu0
        %v930 = vadd.f32 0.0, %v929
        %v931 = vpop.f32.mrf.mxu0
        %v932 = vadd.f32 0.0, %v931
        %933 = vmatmul.bf16.gmra.mxu0 %v535
        %v934 = vpop.f32.mrf.mxu0
        %v935 = vadd.f32 0.0, %v934
        %v936 = vpop.f32.mrf.mxu0
        %v937 = vadd.f32 0.0, %v936
        %938 = vmatmul.bf16.gmra.mxu0 %v536
        %v939 = vpop.f32.mrf.mxu0
        %v940 = vadd.f32 0.0, %v939
        %v941 = vpop.f32.mrf.mxu0
        %v942 = vadd.f32 0.0, %v941
        %943 = vmatmul.bf16.gmra.mxu0 %v537
        %v944 = vpop.f32.mrf.mxu0
        %v945 = vadd.f32 0.0, %v944
        %v946 = vpop.f32.mrf.mxu0
        %v947 = vadd.f32 0.0, %v946
        %948 = vmatmul.bf16.gmra.mxu0 %v538
        %v949 = vpop.f32.mrf.mxu0
        %v950 = vadd.f32 0.0, %v949
        %v951 = vpop.f32.mrf.mxu0
        %v952 = vadd.f32 0.0, %v951
        %953 = vmatmul.bf16.gmra.mxu0 %v539
        %v954 = vpop.f32.mrf.mxu0
        %v955 = vadd.f32 0.0, %v954
        %v956 = vpop.f32.mrf.mxu0
        %v957 = vadd.f32 0.0, %v956
        %958 = vmatmul.bf16.gmra.mxu0 %v540
        %v959 = vpop.f32.mrf.mxu0
        %v960 = vadd.f32 0.0, %v959
        %v961 = vpop.f32.mrf.mxu0
        %v962 = vadd.f32 0.0, %v961
        %963 = vmatmul.bf16.gmra.mxu0 %v541
        %v964 = vpop.f32.mrf.mxu0
        %v965 = vadd.f32 0.0, %v964
        %v966 = vpop.f32.mrf.mxu0
        %v967 = vadd.f32 0.0, %v966
        %968 = vmatmul.bf16.gmra.mxu0 %v542
        %v969 = vpop.f32.mrf.mxu0
        %v970 = vadd.f32 0.0, %v969
        %v971 = vpop.f32.mrf.mxu0
        %v972 = vadd.f32 0.0, %v971
        %973 = vmatmul.bf16.gmra.mxu0 %v543
        %v974 = vpop.f32.mrf.mxu0
        %v975 = vadd.f32 0.0, %v974
        %v976 = vpop.f32.mrf.mxu0
        %v977 = vadd.f32 0.0, %v976
        %978 = vmatmul.bf16.gmra.mxu0 %v544
        %v979 = vpop.f32.mrf.mxu0
        %v980 = vadd.f32 0.0, %v979
        %v981 = vpop.f32.mrf.mxu0
        %v982 = vadd.f32 0.0, %v981
        %983 = vmatmul.bf16.gmra.mxu0 %v545
        %v984 = vpop.f32.mrf.mxu0
        %v985 = vadd.f32 0.0, %v984
        %v986 = vpop.f32.mrf.mxu0
        %v987 = vadd.f32 0.0, %v986
        %988 = vdwg.mxu0
        %989 = vmatpush.bf16.msra.mxu0 %v689
        %990 = vmatpush.bf16.msra.mxu0 %v685
        %991 = vmatpush.bf16.msra.mxu0 %v681
        %992 = vmatpush.bf16.msra.mxu0 %v677
        %993 = vmatpush.bf16.msra.mxu0 %v673
        %994 = vmatpush.bf16.msra.mxu0 %v669
        %995 = vmatpush.bf16.msra.mxu0 %v665
        %996 = vmatpush.bf16.msra.mxu0 %v661
        %997 = vmatmul.bf16.gmra.mxu0 %v530
        %v998 = vpop.f32.mrf.mxu0
        %v999 = vadd.f32 0.0, %v998
        %v1000 = vpop.f32.mrf.mxu0
        %v1001 = vadd.f32 0.0, %v1000
        %1002 = vmatmul.bf16.gmra.mxu0 %v531
        %v1003 = vpop.f32.mrf.mxu0
        %v1004 = vadd.f32 0.0, %v1003
        %v1005 = vpop.f32.mrf.mxu0
        %v1006 = vadd.f32 0.0, %v1005
        %1007 = vmatmul.bf16.gmra.mxu0 %v532
        %v1008 = vpop.f32.mrf.mxu0
        %v1009 = vadd.f32 0.0, %v1008
        %v1010 = vpop.f32.mrf.mxu0
        %v1011 = vadd.f32 0.0, %v1010
        %1012 = vmatmul.bf16.gmra.mxu0 %v533
        %v1013 = vpop.f32.mrf.mxu0
        %v1014 = vadd.f32 0.0, %v1013
        %v1015 = vpop.f32.mrf.mxu0
        %v1016 = vadd.f32 0.0, %v1015
        %1017 = vmatmul.bf16.gmra.mxu0 %v534
        %v1018 = vpop.f32.mrf.mxu0
        %v1019 = vadd.f32 0.0, %v1018
        %v1020 = vpop.f32.mrf.mxu0
        %v1021 = vadd.f32 0.0, %v1020
        %1022 = vmatmul.bf16.gmra.mxu0 %v535
        %v1023 = vpop.f32.mrf.mxu0
        %v1024 = vadd.f32 0.0, %v1023
        %v1025 = vpop.f32.mrf.mxu0
        %v1026 = vadd.f32 0.0, %v1025
        %1027 = vmatmul.bf16.gmra.mxu0 %v536
        %v1028 = vpop.f32.mrf.mxu0
        %v1029 = vadd.f32 0.0, %v1028
        %v1030 = vpop.f32.mrf.mxu0
        %v1031 = vadd.f32 0.0, %v1030
        %1032 = vmatmul.bf16.gmra.mxu0 %v537
        %v1033 = vpop.f32.mrf.mxu0
        %v1034 = vadd.f32 0.0, %v1033
        %v1035 = vpop.f32.mrf.mxu0
        %v1036 = vadd.f32 0.0, %v1035
        %1037 = vmatmul.bf16.gmra.mxu0 %v538
        %v1038 = vpop.f32.mrf.mxu0
        %v1039 = vadd.f32 0.0, %v1038
        %v1040 = vpop.f32.mrf.mxu0
        %v1041 = vadd.f32 0.0, %v1040
        %1042 = vmatmul.bf16.gmra.mxu0 %v539
        %v1043 = vpop.f32.mrf.mxu0
        %v1044 = vadd.f32 0.0, %v1043
        %v1045 = vpop.f32.mrf.mxu0
        %v1046 = vadd.f32 0.0, %v1045
        %1047 = vmatmul.bf16.gmra.mxu0 %v540
        %v1048 = vpop.f32.mrf.mxu0
        %v1049 = vadd.f32 0.0, %v1048
        %v1050 = vpop.f32.mrf.mxu0
        %v1051 = vadd.f32 0.0, %v1050
        %1052 = vmatmul.bf16.gmra.mxu0 %v541
        %v1053 = vpop.f32.mrf.mxu0
        %v1054 = vadd.f32 0.0, %v1053
        %v1055 = vpop.f32.mrf.mxu0
        %v1056 = vadd.f32 0.0, %v1055
        %1057 = vmatmul.bf16.gmra.mxu0 %v542
        %v1058 = vpop.f32.mrf.mxu0
        %v1059 = vadd.f32 0.0, %v1058
        %v1060 = vpop.f32.mrf.mxu0
        %v1061 = vadd.f32 0.0, %v1060
        %1062 = vmatmul.bf16.gmra.mxu0 %v543
        %v1063 = vpop.f32.mrf.mxu0
        %v1064 = vadd.f32 0.0, %v1063
        %v1065 = vpop.f32.mrf.mxu0
        %v1066 = vadd.f32 0.0, %v1065
        %1067 = vmatmul.bf16.gmra.mxu0 %v544
        %v1068 = vpop.f32.mrf.mxu0
        %v1069 = vadd.f32 0.0, %v1068
        %v1070 = vpop.f32.mrf.mxu0
        %v1071 = vadd.f32 0.0, %v1070
        %1072 = vmatmul.bf16.gmra.mxu0 %v545
        %v1073 = vpop.f32.mrf.mxu0
        %v1074 = vadd.f32 0.0, %v1073
        %v1075 = vpop.f32.mrf.mxu0
        %v1076 = vadd.f32 0.0, %v1075
        %1077 = vdwg.mxu0
        %v1078 = vld [vmem:[%s323] sm:$0xf]
        %v1080 = vperm.slane %v1078, 0
        %v1081 = vperm.slane %v1078, 1
        %v1082 = vperm.slane %v1078, 2
        %v1083 = vperm.slane %v1078, 3
        %v1088 = vmul.f32 %v732, %v1080
        %v1089 = vmul.f32 %v821, %v1081
        %v1090 = vmul.f32 %v910, %v1082
        %v1091 = vmul.f32 %v999, %v1083
        %v1092 = vmul.f32 %v734, %v1080
        %v1093 = vmul.f32 %v823, %v1081
        %v1094 = vmul.f32 %v912, %v1082
        %v1095 = vmul.f32 %v1001, %v1083
        %v1096 = vmul.f32 %v737, %v1080
        %v1097 = vmul.f32 %v826, %v1081
        %v1098 = vmul.f32 %v915, %v1082
        %v1099 = vmul.f32 %v1004, %v1083
        %v1100 = vmul.f32 %v739, %v1080
        %v1101 = vmul.f32 %v828, %v1081
        %v1102 = vmul.f32 %v917, %v1082
        %v1103 = vmul.f32 %v1006, %v1083
        %v1104 = vmul.f32 %v742, %v1080
        %v1105 = vmul.f32 %v831, %v1081
        %v1106 = vmul.f32 %v920, %v1082
        %v1107 = vmul.f32 %v1009, %v1083
        %v1108 = vmul.f32 %v744, %v1080
        %v1109 = vmul.f32 %v833, %v1081
        %v1110 = vmul.f32 %v922, %v1082
        %v1111 = vmul.f32 %v1011, %v1083
        %v1112 = vmul.f32 %v747, %v1080
        %v1113 = vmul.f32 %v836, %v1081
        %v1114 = vmul.f32 %v925, %v1082
        %v1115 = vmul.f32 %v1014, %v1083
        %v1116 = vmul.f32 %v749, %v1080
        %v1117 = vmul.f32 %v838, %v1081
        %v1118 = vmul.f32 %v927, %v1082
        %v1119 = vmul.f32 %v1016, %v1083
        %v1120 = vmul.f32 %v752, %v1080
        %v1121 = vmul.f32 %v841, %v1081
        %v1122 = vmul.f32 %v930, %v1082
        %v1123 = vmul.f32 %v1019, %v1083
        %v1124 = vmul.f32 %v754, %v1080
        %v1125 = vmul.f32 %v843, %v1081
        %v1126 = vmul.f32 %v932, %v1082
        %v1127 = vmul.f32 %v1021, %v1083
        %v1128 = vmul.f32 %v757, %v1080
        %v1129 = vmul.f32 %v846, %v1081
        %v1130 = vmul.f32 %v935, %v1082
        %v1131 = vmul.f32 %v1024, %v1083
        %v1132 = vmul.f32 %v759, %v1080
        %v1133 = vmul.f32 %v848, %v1081
        %v1134 = vmul.f32 %v937, %v1082
        %v1135 = vmul.f32 %v1026, %v1083
        %v1136 = vmul.f32 %v762, %v1080
        %v1137 = vmul.f32 %v851, %v1081
        %v1138 = vmul.f32 %v940, %v1082
        %v1139 = vmul.f32 %v1029, %v1083
        %v1140 = vmul.f32 %v764, %v1080
        %v1141 = vmul.f32 %v853, %v1081
        %v1142 = vmul.f32 %v942, %v1082
        %v1143 = vmul.f32 %v1031, %v1083
        %v1144 = vmul.f32 %v767, %v1080
        %v1145 = vmul.f32 %v856, %v1081
        %v1146 = vmul.f32 %v945, %v1082
        %v1147 = vmul.f32 %v1034, %v1083
        %v1148 = vmul.f32 %v769, %v1080
        %v1149 = vmul.f32 %v858, %v1081
        %v1150 = vmul.f32 %v947, %v1082
        %v1151 = vmul.f32 %v1036, %v1083
        %v1152 = vmul.f32 %v772, %v1080
        %v1153 = vmul.f32 %v861, %v1081
        %v1154 = vmul.f32 %v950, %v1082
        %v1155 = vmul.f32 %v1039, %v1083
        %v1156 = vmul.f32 %v774, %v1080
        %v1157 = vmul.f32 %v863, %v1081
        %v1158 = vmul.f32 %v952, %v1082
        %v1159 = vmul.f32 %v1041, %v1083
        %v1160 = vmul.f32 %v777, %v1080
        %v1161 = vmul.f32 %v866, %v1081
        %v1162 = vmul.f32 %v955, %v1082
        %v1163 = vmul.f32 %v1044, %v1083
        %v1164 = vmul.f32 %v779, %v1080
        %v1165 = vmul.f32 %v868, %v1081
        %v1166 = vmul.f32 %v957, %v1082
        %v1167 = vmul.f32 %v1046, %v1083
        %v1168 = vmul.f32 %v782, %v1080
        %v1169 = vmul.f32 %v871, %v1081
        %v1170 = vmul.f32 %v960, %v1082
        %v1171 = vmul.f32 %v1049, %v1083
        %v1172 = vmul.f32 %v784, %v1080
        %v1173 = vmul.f32 %v873, %v1081
        %v1174 = vmul.f32 %v962, %v1082
        %v1175 = vmul.f32 %v1051, %v1083
        %v1176 = vmul.f32 %v787, %v1080
        %v1177 = vmul.f32 %v876, %v1081
        %v1178 = vmul.f32 %v965, %v1082
        %v1179 = vmul.f32 %v1054, %v1083
        %v1180 = vmul.f32 %v789, %v1080
        %v1181 = vmul.f32 %v878, %v1081
        %v1182 = vmul.f32 %v967, %v1082
        %v1183 = vmul.f32 %v1056, %v1083
        %v1184 = vmul.f32 %v792, %v1080
        %v1185 = vmul.f32 %v881, %v1081
        %v1186 = vmul.f32 %v970, %v1082
        %v1187 = vmul.f32 %v1059, %v1083
        %v1188 = vmul.f32 %v794, %v1080
        %v1189 = vmul.f32 %v883, %v1081
        %v1190 = vmul.f32 %v972, %v1082
        %v1191 = vmul.f32 %v1061, %v1083
        %v1192 = vmul.f32 %v797, %v1080
        %v1193 = vmul.f32 %v886, %v1081
        %v1194 = vmul.f32 %v975, %v1082
        %v1195 = vmul.f32 %v1064, %v1083
        %v1196 = vmul.f32 %v799, %v1080
        %v1197 = vmul.f32 %v888, %v1081
        %v1198 = vmul.f32 %v977, %v1082
        %v1199 = vmul.f32 %v1066, %v1083
        %v1200 = vmul.f32 %v802, %v1080
        %v1201 = vmul.f32 %v891, %v1081
        %v1202 = vmul.f32 %v980, %v1082
        %v1203 = vmul.f32 %v1069, %v1083
        %v1204 = vmul.f32 %v804, %v1080
        %v1205 = vmul.f32 %v893, %v1081
        %v1206 = vmul.f32 %v982, %v1082
        %v1207 = vmul.f32 %v1071, %v1083
        %v1208 = vmul.f32 %v807, %v1080
        %v1209 = vmul.f32 %v896, %v1081
        %v1210 = vmul.f32 %v985, %v1082
        %v1211 = vmul.f32 %v1074, %v1083
        %v1212 = vmul.f32 %v809, %v1080
        %v1213 = vmul.f32 %v898, %v1081
        %v1214 = vmul.f32 %v987, %v1082
        %v1215 = vmul.f32 %v1076, %v1083
        %v1216 = vld [vmem:[%s333] sm:$0xf]
        %v1218 = vperm.slane %v1216, 0
        %v1219 = vperm.slane %v1216, 1
        %v1220 = vperm.slane %v1216, 2
        %v1221 = vperm.slane %v1216, 3
        %v1226 = vadd.f32 %v1088, %v1218
        %v1227 = vadd.f32 %v1089, %v1219
        %v1228 = vadd.f32 %v1090, %v1220
        %v1229 = vadd.f32 %v1091, %v1221
        %v1230 = vadd.f32 %v1092, %v1218
        %v1231 = vadd.f32 %v1093, %v1219
        %v1232 = vadd.f32 %v1094, %v1220
        %v1233 = vadd.f32 %v1095, %v1221
        %v1234 = vadd.f32 %v1096, %v1218
        %v1235 = vadd.f32 %v1097, %v1219
        %v1236 = vadd.f32 %v1098, %v1220
        %v1237 = vadd.f32 %v1099, %v1221
        %v1238 = vadd.f32 %v1100, %v1218
        %v1239 = vadd.f32 %v1101, %v1219
        %v1240 = vadd.f32 %v1102, %v1220
        %v1241 = vadd.f32 %v1103, %v1221
        %v1242 = vadd.f32 %v1104, %v1218
        %v1243 = vadd.f32 %v1105, %v1219
        %v1244 = vadd.f32 %v1106, %v1220
        %v1245 = vadd.f32 %v1107, %v1221
        %v1246 = vadd.f32 %v1108, %v1218
        %v1247 = vadd.f32 %v1109, %v1219
        %v1248 = vadd.f32 %v1110, %v1220
        %v1249 = vadd.f32 %v1111, %v1221
        %v1250 = vadd.f32 %v1112, %v1218
        %v1251 = vadd.f32 %v1113, %v1219
        %v1252 = vadd.f32 %v1114, %v1220
        %v1253 = vadd.f32 %v1115, %v1221
        %v1254 = vadd.f32 %v1116, %v1218
        %v1255 = vadd.f32 %v1117, %v1219
        %v1256 = vadd.f32 %v1118, %v1220
        %v1257 = vadd.f32 %v1119, %v1221
        %v1258 = vadd.f32 %v1120, %v1218
        %v1259 = vadd.f32 %v1121, %v1219
        %v1260 = vadd.f32 %v1122, %v1220
        %v1261 = vadd.f32 %v1123, %v1221
        %v1262 = vadd.f32 %v1124, %v1218
        %v1263 = vadd.f32 %v1125, %v1219
        %v1264 = vadd.f32 %v1126, %v1220
        %v1265 = vadd.f32 %v1127, %v1221
        %v1266 = vadd.f32 %v1128, %v1218
        %v1267 = vadd.f32 %v1129, %v1219
        %v1268 = vadd.f32 %v1130, %v1220
        %v1269 = vadd.f32 %v1131, %v1221
        %v1270 = vadd.f32 %v1132, %v1218
        %v1271 = vadd.f32 %v1133, %v1219
        %v1272 = vadd.f32 %v1134, %v1220
        %v1273 = vadd.f32 %v1135, %v1221
        %v1274 = vadd.f32 %v1136, %v1218
        %v1275 = vadd.f32 %v1137, %v1219
        %v1276 = vadd.f32 %v1138, %v1220
        %v1277 = vadd.f32 %v1139, %v1221
        %v1278 = vadd.f32 %v1140, %v1218
        %v1279 = vadd.f32 %v1141, %v1219
        %v1280 = vadd.f32 %v1142, %v1220
        %v1281 = vadd.f32 %v1143, %v1221
        %v1282 = vadd.f32 %v1144, %v1218
        %v1283 = vadd.f32 %v1145, %v1219
        %v1284 = vadd.f32 %v1146, %v1220
        %v1285 = vadd.f32 %v1147, %v1221
        %v1286 = vadd.f32 %v1148, %v1218
        %v1287 = vadd.f32 %v1149, %v1219
        %v1288 = vadd.f32 %v1150, %v1220
        %v1289 = vadd.f32 %v1151, %v1221
        %v1290 = vadd.f32 %v1152, %v1218
        %v1291 = vadd.f32 %v1153, %v1219
        %v1292 = vadd.f32 %v1154, %v1220
        %v1293 = vadd.f32 %v1155, %v1221
        %v1294 = vadd.f32 %v1156, %v1218
        %v1295 = vadd.f32 %v1157, %v1219
        %v1296 = vadd.f32 %v1158, %v1220
        %v1297 = vadd.f32 %v1159, %v1221
        %v1298 = vadd.f32 %v1160, %v1218
        %v1299 = vadd.f32 %v1161, %v1219
        %v1300 = vadd.f32 %v1162, %v1220
        %v1301 = vadd.f32 %v1163, %v1221
        %v1302 = vadd.f32 %v1164, %v1218
        %v1303 = vadd.f32 %v1165, %v1219
        %v1304 = vadd.f32 %v1166, %v1220
        %v1305 = vadd.f32 %v1167, %v1221
        %v1306 = vadd.f32 %v1168, %v1218
        %v1307 = vadd.f32 %v1169, %v1219
        %v1308 = vadd.f32 %v1170, %v1220
        %v1309 = vadd.f32 %v1171, %v1221
        %v1310 = vadd.f32 %v1172, %v1218
        %v1311 = vadd.f32 %v1173, %v1219
        %v1312 = vadd.f32 %v1174, %v1220
        %v1313 = vadd.f32 %v1175, %v1221
        %v1314 = vadd.f32 %v1176, %v1218
        %v1315 = vadd.f32 %v1177, %v1219
        %v1316 = vadd.f32 %v1178, %v1220
        %v1317 = vadd.f32 %v1179, %v1221
        %v1318 = vadd.f32 %v1180, %v1218
        %v1319 = vadd.f32 %v1181, %v1219
        %v1320 = vadd.f32 %v1182, %v1220
        %v1321 = vadd.f32 %v1183, %v1221
        %v1322 = vadd.f32 %v1184, %v1218
        %v1323 = vadd.f32 %v1185, %v1219
        %v1324 = vadd.f32 %v1186, %v1220
        %v1325 = vadd.f32 %v1187, %v1221
        %v1326 = vadd.f32 %v1188, %v1218
        %v1327 = vadd.f32 %v1189, %v1219
        %v1328 = vadd.f32 %v1190, %v1220
        %v1329 = vadd.f32 %v1191, %v1221
        %v1330 = vadd.f32 %v1192, %v1218
        %v1331 = vadd.f32 %v1193, %v1219
        %v1332 = vadd.f32 %v1194, %v1220
        %v1333 = vadd.f32 %v1195, %v1221
        %v1334 = vadd.f32 %v1196, %v1218
        %v1335 = vadd.f32 %v1197, %v1219
        %v1336 = vadd.f32 %v1198, %v1220
        %v1337 = vadd.f32 %v1199, %v1221
        %v1338 = vadd.f32 %v1200, %v1218
        %v1339 = vadd.f32 %v1201, %v1219
        %v1340 = vadd.f32 %v1202, %v1220
        %v1341 = vadd.f32 %v1203, %v1221
        %v1342 = vadd.f32 %v1204, %v1218
        %v1343 = vadd.f32 %v1205, %v1219
        %v1344 = vadd.f32 %v1206, %v1220
        %v1345 = vadd.f32 %v1207, %v1221
        %v1346 = vadd.f32 %v1208, %v1218
        %v1347 = vadd.f32 %v1209, %v1219
        %v1348 = vadd.f32 %v1210, %v1220
        %v1349 = vadd.f32 %v1211, %v1221
        %v1350 = vadd.f32 %v1212, %v1218
        %v1351 = vadd.f32 %v1213, %v1219
        %v1352 = vadd.f32 %v1214, %v1220
        %v1353 = vadd.f32 %v1215, %v1221
        %v1354 = vsub.f32 0.0, %v1226
        %v1355 = vsub.f32 0.0, %v1227
        %v1356 = vsub.f32 0.0, %v1228
        %v1357 = vsub.f32 0.0, %v1229
        %v1358 = vsub.f32 0.0, %v1230
        %v1359 = vsub.f32 0.0, %v1231
        %v1360 = vsub.f32 0.0, %v1232
        %v1361 = vsub.f32 0.0, %v1233
        %v1362 = vsub.f32 0.0, %v1234
        %v1363 = vsub.f32 0.0, %v1235
        %v1364 = vsub.f32 0.0, %v1236
        %v1365 = vsub.f32 0.0, %v1237
        %v1366 = vsub.f32 0.0, %v1238
        %v1367 = vsub.f32 0.0, %v1239
        %v1368 = vsub.f32 0.0, %v1240
        %v1369 = vsub.f32 0.0, %v1241
        %v1370 = vsub.f32 0.0, %v1242
        %v1371 = vsub.f32 0.0, %v1243
        %v1372 = vsub.f32 0.0, %v1244
        %v1373 = vsub.f32 0.0, %v1245
        %v1374 = vsub.f32 0.0, %v1246
        %v1375 = vsub.f32 0.0, %v1247
        %v1376 = vsub.f32 0.0, %v1248
        %v1377 = vsub.f32 0.0, %v1249
        %v1378 = vsub.f32 0.0, %v1250
        %v1379 = vsub.f32 0.0, %v1251
        %v1380 = vsub.f32 0.0, %v1252
        %v1381 = vsub.f32 0.0, %v1253
        %v1382 = vsub.f32 0.0, %v1254
        %v1383 = vsub.f32 0.0, %v1255
        %v1384 = vsub.f32 0.0, %v1256
        %v1385 = vsub.f32 0.0, %v1257
        %v1386 = vsub.f32 0.0, %v1258
        %v1387 = vsub.f32 0.0, %v1259
        %v1388 = vsub.f32 0.0, %v1260
        %v1389 = vsub.f32 0.0, %v1261
        %v1390 = vsub.f32 0.0, %v1262
        %v1391 = vsub.f32 0.0, %v1263
        %v1392 = vsub.f32 0.0, %v1264
        %v1393 = vsub.f32 0.0, %v1265
        %v1394 = vsub.f32 0.0, %v1266
        %v1395 = vsub.f32 0.0, %v1267
        %v1396 = vsub.f32 0.0, %v1268
        %v1397 = vsub.f32 0.0, %v1269
        %v1398 = vsub.f32 0.0, %v1270
        %v1399 = vsub.f32 0.0, %v1271
        %v1400 = vsub.f32 0.0, %v1272
        %v1401 = vsub.f32 0.0, %v1273
        %v1402 = vsub.f32 0.0, %v1274
        %v1403 = vsub.f32 0.0, %v1275
        %v1404 = vsub.f32 0.0, %v1276
        %v1405 = vsub.f32 0.0, %v1277
        %v1406 = vsub.f32 0.0, %v1278
        %v1407 = vsub.f32 0.0, %v1279
        %v1408 = vsub.f32 0.0, %v1280
        %v1409 = vsub.f32 0.0, %v1281
        %v1410 = vsub.f32 0.0, %v1282
        %v1411 = vsub.f32 0.0, %v1283
        %v1412 = vsub.f32 0.0, %v1284
        %v1413 = vsub.f32 0.0, %v1285
        %v1414 = vsub.f32 0.0, %v1286
        %v1415 = vsub.f32 0.0, %v1287
        %v1416 = vsub.f32 0.0, %v1288
        %v1417 = vsub.f32 0.0, %v1289
        %v1418 = vsub.f32 0.0, %v1290
        %v1419 = vsub.f32 0.0, %v1291
        %v1420 = vsub.f32 0.0, %v1292
        %v1421 = vsub.f32 0.0, %v1293
        %v1422 = vsub.f32 0.0, %v1294
        %v1423 = vsub.f32 0.0, %v1295
        %v1424 = vsub.f32 0.0, %v1296
        %v1425 = vsub.f32 0.0, %v1297
        %v1426 = vsub.f32 0.0, %v1298
        %v1427 = vsub.f32 0.0, %v1299
        %v1428 = vsub.f32 0.0, %v1300
        %v1429 = vsub.f32 0.0, %v1301
        %v1430 = vsub.f32 0.0, %v1302
        %v1431 = vsub.f32 0.0, %v1303
        %v1432 = vsub.f32 0.0, %v1304
        %v1433 = vsub.f32 0.0, %v1305
        %v1434 = vsub.f32 0.0, %v1306
        %v1435 = vsub.f32 0.0, %v1307
        %v1436 = vsub.f32 0.0, %v1308
        %v1437 = vsub.f32 0.0, %v1309
        %v1438 = vsub.f32 0.0, %v1310
        %v1439 = vsub.f32 0.0, %v1311
        %v1440 = vsub.f32 0.0, %v1312
        %v1441 = vsub.f32 0.0, %v1313
        %v1442 = vsub.f32 0.0, %v1314
        %v1443 = vsub.f32 0.0, %v1315
        %v1444 = vsub.f32 0.0, %v1316
        %v1445 = vsub.f32 0.0, %v1317
        %v1446 = vsub.f32 0.0, %v1318
        %v1447 = vsub.f32 0.0, %v1319
        %v1448 = vsub.f32 0.0, %v1320
        %v1449 = vsub.f32 0.0, %v1321
        %v1450 = vsub.f32 0.0, %v1322
        %v1451 = vsub.f32 0.0, %v1323
        %v1452 = vsub.f32 0.0, %v1324
        %v1453 = vsub.f32 0.0, %v1325
        %v1454 = vsub.f32 0.0, %v1326
        %v1455 = vsub.f32 0.0, %v1327
        %v1456 = vsub.f32 0.0, %v1328
        %v1457 = vsub.f32 0.0, %v1329
        %v1458 = vsub.f32 0.0, %v1330
        %v1459 = vsub.f32 0.0, %v1331
        %v1460 = vsub.f32 0.0, %v1332
        %v1461 = vsub.f32 0.0, %v1333
        %v1462 = vsub.f32 0.0, %v1334
        %v1463 = vsub.f32 0.0, %v1335
        %v1464 = vsub.f32 0.0, %v1336
        %v1465 = vsub.f32 0.0, %v1337
        %v1466 = vsub.f32 0.0, %v1338
        %v1467 = vsub.f32 0.0, %v1339
        %v1468 = vsub.f32 0.0, %v1340
        %v1469 = vsub.f32 0.0, %v1341
        %v1470 = vsub.f32 0.0, %v1342
        %v1471 = vsub.f32 0.0, %v1343
        %v1472 = vsub.f32 0.0, %v1344
        %v1473 = vsub.f32 0.0, %v1345
        %v1474 = vsub.f32 0.0, %v1346
        %v1475 = vsub.f32 0.0, %v1347
        %v1476 = vsub.f32 0.0, %v1348
        %v1477 = vsub.f32 0.0, %v1349
        %v1478 = vsub.f32 0.0, %v1350
        %v1479 = vsub.f32 0.0, %v1351
        %v1480 = vsub.f32 0.0, %v1352
        %v1481 = vsub.f32 0.0, %v1353
        %v1482 = vmul.f32 %v1354, 1.442695
        %v1483 = vpow.pop %v1482
        %v1484 = vmul.f32 %v1355, 1.442695
        %v1485 = vpow.pop %v1484
        %v1486 = vmul.f32 %v1356, 1.442695
        %v1487 = vpow.pop %v1486
        %v1488 = vmul.f32 %v1357, 1.442695
        %v1489 = vpow.pop %v1488
        %v1490 = vmul.f32 %v1358, 1.442695
        %v1491 = vpow.pop %v1490
        %v1492 = vmul.f32 %v1359, 1.442695
        %v1493 = vpow.pop %v1492
        %v1494 = vmul.f32 %v1360, 1.442695
        %v1495 = vpow.pop %v1494
        %v1496 = vmul.f32 %v1361, 1.442695
        %v1497 = vpow.pop %v1496
        %v1498 = vmul.f32 %v1362, 1.442695
        %v1499 = vpow.pop %v1498
        %v1500 = vmul.f32 %v1363, 1.442695
        %v1501 = vpow.pop %v1500
        %v1502 = vmul.f32 %v1364, 1.442695
        %v1503 = vpow.pop %v1502
        %v1504 = vmul.f32 %v1365, 1.442695
        %v1505 = vpow.pop %v1504
        %v1506 = vmul.f32 %v1366, 1.442695
        %v1507 = vpow.pop %v1506
        %v1508 = vmul.f32 %v1367, 1.442695
        %v1509 = vpow.pop %v1508
        %v1510 = vmul.f32 %v1368, 1.442695
        %v1511 = vpow.pop %v1510
        %v1512 = vmul.f32 %v1369, 1.442695
        %v1513 = vpow.pop %v1512
        %v1514 = vmul.f32 %v1370, 1.442695
        %v1515 = vpow.pop %v1514
        %v1516 = vmul.f32 %v1371, 1.442695
        %v1517 = vpow.pop %v1516
        %v1518 = vmul.f32 %v1372, 1.442695
        %v1519 = vpow.pop %v1518
        %v1520 = vmul.f32 %v1373, 1.442695
        %v1521 = vpow.pop %v1520
        %v1522 = vmul.f32 %v1374, 1.442695
        %v1523 = vpow.pop %v1522
        %v1524 = vmul.f32 %v1375, 1.442695
        %v1525 = vpow.pop %v1524
        %v1526 = vmul.f32 %v1376, 1.442695
        %v1527 = vpow.pop %v1526
        %v1528 = vmul.f32 %v1377, 1.442695
        %v1529 = vpow.pop %v1528
        %v1530 = vmul.f32 %v1378, 1.442695
        %v1531 = vpow.pop %v1530
        %v1532 = vmul.f32 %v1379, 1.442695
        %v1533 = vpow.pop %v1532
        %v1534 = vmul.f32 %v1380, 1.442695
        %v1535 = vpow.pop %v1534
        %v1536 = vmul.f32 %v1381, 1.442695
        %v1537 = vpow.pop %v1536
        %v1538 = vmul.f32 %v1382, 1.442695
        %v1539 = vpow.pop %v1538
        %v1540 = vmul.f32 %v1383, 1.442695
        %v1541 = vpow.pop %v1540
        %v1542 = vmul.f32 %v1384, 1.442695
        %v1543 = vpow.pop %v1542
        %v1544 = vmul.f32 %v1385, 1.442695
        %v1545 = vpow.pop %v1544
        %v1546 = vmul.f32 %v1386, 1.442695
        %v1547 = vpow.pop %v1546
        %v1548 = vmul.f32 %v1387, 1.442695
        %v1549 = vpow.pop %v1548
        %v1550 = vmul.f32 %v1388, 1.442695
        %v1551 = vpow.pop %v1550
        %v1552 = vmul.f32 %v1389, 1.442695
        %v1553 = vpow.pop %v1552
        %v1554 = vmul.f32 %v1390, 1.442695
        %v1555 = vpow.pop %v1554
        %v1556 = vmul.f32 %v1391, 1.442695
        %v1557 = vpow.pop %v1556
        %v1558 = vmul.f32 %v1392, 1.442695
        %v1559 = vpow.pop %v1558
        %v1560 = vmul.f32 %v1393, 1.442695
        %v1561 = vpow.pop %v1560
        %v1562 = vmul.f32 %v1394, 1.442695
        %v1563 = vpow.pop %v1562
        %v1564 = vmul.f32 %v1395, 1.442695
        %v1565 = vpow.pop %v1564
        %v1566 = vmul.f32 %v1396, 1.442695
        %v1567 = vpow.pop %v1566
        %v1568 = vmul.f32 %v1397, 1.442695
        %v1569 = vpow.pop %v1568
        %v1570 = vmul.f32 %v1398, 1.442695
        %v1571 = vpow.pop %v1570
        %v1572 = vmul.f32 %v1399, 1.442695
        %v1573 = vpow.pop %v1572
        %v1574 = vmul.f32 %v1400, 1.442695
        %v1575 = vpow.pop %v1574
        %v1576 = vmul.f32 %v1401, 1.442695
        %v1577 = vpow.pop %v1576
        %v1578 = vmul.f32 %v1402, 1.442695
        %v1579 = vpow.pop %v1578
        %v1580 = vmul.f32 %v1403, 1.442695
        %v1581 = vpow.pop %v1580
        %v1582 = vmul.f32 %v1404, 1.442695
        %v1583 = vpow.pop %v1582
        %v1584 = vmul.f32 %v1405, 1.442695
        %v1585 = vpow.pop %v1584
        %v1586 = vmul.f32 %v1406, 1.442695
        %v1587 = vpow.pop %v1586
        %v1588 = vmul.f32 %v1407, 1.442695
        %v1589 = vpow.pop %v1588
        %v1590 = vmul.f32 %v1408, 1.442695
        %v1591 = vpow.pop %v1590
        %v1592 = vmul.f32 %v1409, 1.442695
        %v1593 = vpow.pop %v1592
        %v1594 = vmul.f32 %v1410, 1.442695
        %v1595 = vpow.pop %v1594
        %v1596 = vmul.f32 %v1411, 1.442695
        %v1597 = vpow.pop %v1596
        %v1598 = vmul.f32 %v1412, 1.442695
        %v1599 = vpow.pop %v1598
        %v1600 = vmul.f32 %v1413, 1.442695
        %v1601 = vpow.pop %v1600
        %v1602 = vmul.f32 %v1414, 1.442695
        %v1603 = vpow.pop %v1602
        %v1604 = vmul.f32 %v1415, 1.442695
        %v1605 = vpow.pop %v1604
        %v1606 = vmul.f32 %v1416, 1.442695
        %v1607 = vpow.pop %v1606
        %v1608 = vmul.f32 %v1417, 1.442695
        %v1609 = vpow.pop %v1608
        %v1610 = vmul.f32 %v1418, 1.442695
        %v1611 = vpow.pop %v1610
        %v1612 = vmul.f32 %v1419, 1.442695
        %v1613 = vpow.pop %v1612
        %v1614 = vmul.f32 %v1420, 1.442695
        %v1615 = vpow.pop %v1614
        %v1616 = vmul.f32 %v1421, 1.442695
        %v1617 = vpow.pop %v1616
        %v1618 = vmul.f32 %v1422, 1.442695
        %v1619 = vpow.pop %v1618
        %v1620 = vmul.f32 %v1423, 1.442695
        %v1621 = vpow.pop %v1620
        %v1622 = vmul.f32 %v1424, 1.442695
        %v1623 = vpow.pop %v1622
        %v1624 = vmul.f32 %v1425, 1.442695
        %v1625 = vpow.pop %v1624
        %v1626 = vmul.f32 %v1426, 1.442695
        %v1627 = vpow.pop %v1626
        %v1628 = vmul.f32 %v1427, 1.442695
        %v1629 = vpow.pop %v1628
        %v1630 = vmul.f32 %v1428, 1.442695
        %v1631 = vpow.pop %v1630
        %v1632 = vmul.f32 %v1429, 1.442695
        %v1633 = vpow.pop %v1632
        %v1634 = vmul.f32 %v1430, 1.442695
        %v1635 = vpow.pop %v1634
        %v1636 = vmul.f32 %v1431, 1.442695
        %v1637 = vpow.pop %v1636
        %v1638 = vmul.f32 %v1432, 1.442695
        %v1639 = vpow.pop %v1638
        %v1640 = vmul.f32 %v1433, 1.442695
        %v1641 = vpow.pop %v1640
        %v1642 = vmul.f32 %v1434, 1.442695
        %v1643 = vpow.pop %v1642
        %v1644 = vmul.f32 %v1435, 1.442695
        %v1645 = vpow.pop %v1644
        %v1646 = vmul.f32 %v1436, 1.442695
        %v1647 = vpow.pop %v1646
        %v1648 = vmul.f32 %v1437, 1.442695
        %v1649 = vpow.pop %v1648
        %v1650 = vmul.f32 %v1438, 1.442695
        %v1651 = vpow.pop %v1650
        %v1652 = vmul.f32 %v1439, 1.442695
        %v1653 = vpow.pop %v1652
        %v1654 = vmul.f32 %v1440, 1.442695
        %v1655 = vpow.pop %v1654
        %v1656 = vmul.f32 %v1441, 1.442695
        %v1657 = vpow.pop %v1656
        %v1658 = vmul.f32 %v1442, 1.442695
        %v1659 = vpow.pop %v1658
        %v1660 = vmul.f32 %v1443, 1.442695
        %v1661 = vpow.pop %v1660
        %v1662 = vmul.f32 %v1444, 1.442695
        %v1663 = vpow.pop %v1662
        %v1664 = vmul.f32 %v1445, 1.442695
        %v1665 = vpow.pop %v1664
        %v1666 = vmul.f32 %v1446, 1.442695
        %v1667 = vpow.pop %v1666
        %v1668 = vmul.f32 %v1447, 1.442695
        %v1669 = vpow.pop %v1668
        %v1670 = vmul.f32 %v1448, 1.442695
        %v1671 = vpow.pop %v1670
        %v1672 = vmul.f32 %v1449, 1.442695
        %v1673 = vpow.pop %v1672
        %v1674 = vmul.f32 %v1450, 1.442695
        %v1675 = vpow.pop %v1674
        %v1676 = vmul.f32 %v1451, 1.442695
        %v1677 = vpow.pop %v1676
        %v1678 = vmul.f32 %v1452, 1.442695
        %v1679 = vpow.pop %v1678
        %v1680 = vmul.f32 %v1453, 1.442695
        %v1681 = vpow.pop %v1680
        %v1682 = vmul.f32 %v1454, 1.442695
        %v1683 = vpow.pop %v1682
        %v1684 = vmul.f32 %v1455, 1.442695
        %v1685 = vpow.pop %v1684
        %v1686 = vmul.f32 %v1456, 1.442695
        %v1687 = vpow.pop %v1686
        %v1688 = vmul.f32 %v1457, 1.442695
        %v1689 = vpow.pop %v1688
        %v1690 = vmul.f32 %v1458, 1.442695
        %v1691 = vpow.pop %v1690
        %v1692 = vmul.f32 %v1459, 1.442695
        %v1693 = vpow.pop %v1692
        %v1694 = vmul.f32 %v1460, 1.442695
        %v1695 = vpow.pop %v1694
        %v1696 = vmul.f32 %v1461, 1.442695
        %v1697 = vpow.pop %v1696
        %v1698 = vmul.f32 %v1462, 1.442695
        %v1699 = vpow.pop %v1698
        %v1700 = vmul.f32 %v1463, 1.442695
        %v1701 = vpow.pop %v1700
        %v1702 = vmul.f32 %v1464, 1.442695
        %v1703 = vpow.pop %v1702
        %v1704 = vmul.f32 %v1465, 1.442695
        %v1705 = vpow.pop %v1704
        %v1706 = vmul.f32 %v1466, 1.442695
        %v1707 = vpow.pop %v1706
        %v1708 = vmul.f32 %v1467, 1.442695
        %v1709 = vpow.pop %v1708
        %v1710 = vmul.f32 %v1468, 1.442695
        %v1711 = vpow.pop %v1710
        %v1712 = vmul.f32 %v1469, 1.442695
        %v1713 = vpow.pop %v1712
        %v1714 = vmul.f32 %v1470, 1.442695
        %v1715 = vpow.pop %v1714
        %v1716 = vmul.f32 %v1471, 1.442695
        %v1717 = vpow.pop %v1716
        %v1718 = vmul.f32 %v1472, 1.442695
        %v1719 = vpow.pop %v1718
        %v1720 = vmul.f32 %v1473, 1.442695
        %v1721 = vpow.pop %v1720
        %v1722 = vmul.f32 %v1474, 1.442695
        %v1723 = vpow.pop %v1722
        %v1724 = vmul.f32 %v1475, 1.442695
        %v1725 = vpow.pop %v1724
        %v1726 = vmul.f32 %v1476, 1.442695
        %v1727 = vpow.pop %v1726
        %v1728 = vmul.f32 %v1477, 1.442695
        %v1729 = vpow.pop %v1728
        %v1730 = vmul.f32 %v1478, 1.442695
        %v1731 = vpow.pop %v1730
        %v1732 = vmul.f32 %v1479, 1.442695
        %v1733 = vpow.pop %v1732
        %v1734 = vmul.f32 %v1480, 1.442695
        %v1735 = vpow.pop %v1734
        %v1736 = vmul.f32 %v1481, 1.442695
        %v1737 = vpow.pop %v1736
        %v1738 = vadd.f32 %v1483, 1.0
        %v1739 = vadd.f32 %v1485, 1.0
        %v1740 = vadd.f32 %v1487, 1.0
        %v1741 = vadd.f32 %v1489, 1.0
        %v1742 = vadd.f32 %v1491, 1.0
        %v1743 = vadd.f32 %v1493, 1.0
        %v1744 = vadd.f32 %v1495, 1.0
        %v1745 = vadd.f32 %v1497, 1.0
        %v1746 = vadd.f32 %v1499, 1.0
        %v1747 = vadd.f32 %v1501, 1.0
        %v1748 = vadd.f32 %v1503, 1.0
        %v1749 = vadd.f32 %v1505, 1.0
        %v1750 = vadd.f32 %v1507, 1.0
        %v1751 = vadd.f32 %v1509, 1.0
        %v1752 = vadd.f32 %v1511, 1.0
        %v1753 = vadd.f32 %v1513, 1.0
        %v1754 = vadd.f32 %v1515, 1.0
        %v1755 = vadd.f32 %v1517, 1.0
        %v1756 = vadd.f32 %v1519, 1.0
        %v1757 = vadd.f32 %v1521, 1.0
        %v1758 = vadd.f32 %v1523, 1.0
        %v1759 = vadd.f32 %v1525, 1.0
        %v1760 = vadd.f32 %v1527, 1.0
        %v1761 = vadd.f32 %v1529, 1.0
        %v1762 = vadd.f32 %v1531, 1.0
        %v1763 = vadd.f32 %v1533, 1.0
        %v1764 = vadd.f32 %v1535, 1.0
        %v1765 = vadd.f32 %v1537, 1.0
        %v1766 = vadd.f32 %v1539, 1.0
        %v1767 = vadd.f32 %v1541, 1.0
        %v1768 = vadd.f32 %v1543, 1.0
        %v1769 = vadd.f32 %v1545, 1.0
        %v1770 = vadd.f32 %v1547, 1.0
        %v1771 = vadd.f32 %v1549, 1.0
        %v1772 = vadd.f32 %v1551, 1.0
        %v1773 = vadd.f32 %v1553, 1.0
        %v1774 = vadd.f32 %v1555, 1.0
        %v1775 = vadd.f32 %v1557, 1.0
        %v1776 = vadd.f32 %v1559, 1.0
        %v1777 = vadd.f32 %v1561, 1.0
        %v1778 = vadd.f32 %v1563, 1.0
        %v1779 = vadd.f32 %v1565, 1.0
        %v1780 = vadd.f32 %v1567, 1.0
        %v1781 = vadd.f32 %v1569, 1.0
        %v1782 = vadd.f32 %v1571, 1.0
        %v1783 = vadd.f32 %v1573, 1.0
        %v1784 = vadd.f32 %v1575, 1.0
        %v1785 = vadd.f32 %v1577, 1.0
        %v1786 = vadd.f32 %v1579, 1.0
        %v1787 = vadd.f32 %v1581, 1.0
        %v1788 = vadd.f32 %v1583, 1.0
        %v1789 = vadd.f32 %v1585, 1.0
        %v1790 = vadd.f32 %v1587, 1.0
        %v1791 = vadd.f32 %v1589, 1.0
        %v1792 = vadd.f32 %v1591, 1.0
        %v1793 = vadd.f32 %v1593, 1.0
        %v1794 = vadd.f32 %v1595, 1.0
        %v1795 = vadd.f32 %v1597, 1.0
        %v1796 = vadd.f32 %v1599, 1.0
        %v1797 = vadd.f32 %v1601, 1.0
        %v1798 = vadd.f32 %v1603, 1.0
        %v1799 = vadd.f32 %v1605, 1.0
        %v1800 = vadd.f32 %v1607, 1.0
        %v1801 = vadd.f32 %v1609, 1.0
        %v1802 = vadd.f32 %v1611, 1.0
        %v1803 = vadd.f32 %v1613, 1.0
        %v1804 = vadd.f32 %v1615, 1.0
        %v1805 = vadd.f32 %v1617, 1.0
        %v1806 = vadd.f32 %v1619, 1.0
        %v1807 = vadd.f32 %v1621, 1.0
        %v1808 = vadd.f32 %v1623, 1.0
        %v1809 = vadd.f32 %v1625, 1.0
        %v1810 = vadd.f32 %v1627, 1.0
        %v1811 = vadd.f32 %v1629, 1.0
        %v1812 = vadd.f32 %v1631, 1.0
        %v1813 = vadd.f32 %v1633, 1.0
        %v1814 = vadd.f32 %v1635, 1.0
        %v1815 = vadd.f32 %v1637, 1.0
        %v1816 = vadd.f32 %v1639, 1.0
        %v1817 = vadd.f32 %v1641, 1.0
        %v1818 = vadd.f32 %v1643, 1.0
        %v1819 = vadd.f32 %v1645, 1.0
        %v1820 = vadd.f32 %v1647, 1.0
        %v1821 = vadd.f32 %v1649, 1.0
        %v1822 = vadd.f32 %v1651, 1.0
        %v1823 = vadd.f32 %v1653, 1.0
        %v1824 = vadd.f32 %v1655, 1.0
        %v1825 = vadd.f32 %v1657, 1.0
        %v1826 = vadd.f32 %v1659, 1.0
        %v1827 = vadd.f32 %v1661, 1.0
        %v1828 = vadd.f32 %v1663, 1.0
        %v1829 = vadd.f32 %v1665, 1.0
        %v1830 = vadd.f32 %v1667, 1.0
        %v1831 = vadd.f32 %v1669, 1.0
        %v1832 = vadd.f32 %v1671, 1.0
        %v1833 = vadd.f32 %v1673, 1.0
        %v1834 = vadd.f32 %v1675, 1.0
        %v1835 = vadd.f32 %v1677, 1.0
        %v1836 = vadd.f32 %v1679, 1.0
        %v1837 = vadd.f32 %v1681, 1.0
        %v1838 = vadd.f32 %v1683, 1.0
        %v1839 = vadd.f32 %v1685, 1.0
        %v1840 = vadd.f32 %v1687, 1.0
        %v1841 = vadd.f32 %v1689, 1.0
        %v1842 = vadd.f32 %v1691, 1.0
        %v1843 = vadd.f32 %v1693, 1.0
        %v1844 = vadd.f32 %v1695, 1.0
        %v1845 = vadd.f32 %v1697, 1.0
        %v1846 = vadd.f32 %v1699, 1.0
        %v1847 = vadd.f32 %v1701, 1.0
        %v1848 = vadd.f32 %v1703, 1.0
        %v1849 = vadd.f32 %v1705, 1.0
        %v1850 = vadd.f32 %v1707, 1.0
        %v1851 = vadd.f32 %v1709, 1.0
        %v1852 = vadd.f32 %v1711, 1.0
        %v1853 = vadd.f32 %v1713, 1.0
        %v1854 = vadd.f32 %v1715, 1.0
        %v1855 = vadd.f32 %v1717, 1.0
        %v1856 = vadd.f32 %v1719, 1.0
        %v1857 = vadd.f32 %v1721, 1.0
        %v1858 = vadd.f32 %v1723, 1.0
        %v1859 = vadd.f32 %v1725, 1.0
        %v1860 = vadd.f32 %v1727, 1.0
        %v1861 = vadd.f32 %v1729, 1.0
        %v1862 = vadd.f32 %v1731, 1.0
        %v1863 = vadd.f32 %v1733, 1.0
        %v1864 = vadd.f32 %v1735, 1.0
        %v1865 = vadd.f32 %v1737, 1.0
        %v1866 = vrcp.pop %v1738
        %v1867 = vrcp.pop %v1739
        %v1868 = vrcp.pop %v1740
        %v1869 = vrcp.pop %v1741
        %v1870 = vrcp.pop %v1742
        %v1871 = vrcp.pop %v1743
        %v1872 = vrcp.pop %v1744
        %v1873 = vrcp.pop %v1745
        %v1874 = vrcp.pop %v1746
        %v1875 = vrcp.pop %v1747
        %v1876 = vrcp.pop %v1748
        %v1877 = vrcp.pop %v1749
        %v1878 = vrcp.pop %v1750
        %v1879 = vrcp.pop %v1751
        %v1880 = vrcp.pop %v1752
        %v1881 = vrcp.pop %v1753
        %v1882 = vrcp.pop %v1754
        %v1883 = vrcp.pop %v1755
        %v1884 = vrcp.pop %v1756
        %v1885 = vrcp.pop %v1757
        %v1886 = vrcp.pop %v1758
        %v1887 = vrcp.pop %v1759
        %v1888 = vrcp.pop %v1760
        %v1889 = vrcp.pop %v1761
        %v1890 = vrcp.pop %v1762
        %v1891 = vrcp.pop %v1763
        %v1892 = vrcp.pop %v1764
        %v1893 = vrcp.pop %v1765
        %v1894 = vrcp.pop %v1766
        %v1895 = vrcp.pop %v1767
        %v1896 = vrcp.pop %v1768
        %v1897 = vrcp.pop %v1769
        %v1898 = vrcp.pop %v1770
        %v1899 = vrcp.pop %v1771
        %v1900 = vrcp.pop %v1772
        %v1901 = vrcp.pop %v1773
        %v1902 = vrcp.pop %v1774
        %v1903 = vrcp.pop %v1775
        %v1904 = vrcp.pop %v1776
        %v1905 = vrcp.pop %v1777
        %v1906 = vrcp.pop %v1778
        %v1907 = vrcp.pop %v1779
        %v1908 = vrcp.pop %v1780
        %v1909 = vrcp.pop %v1781
        %v1910 = vrcp.pop %v1782
        %v1911 = vrcp.pop %v1783
        %v1912 = vrcp.pop %v1784
        %v1913 = vrcp.pop %v1785
        %v1914 = vrcp.pop %v1786
        %v1915 = vrcp.pop %v1787
        %v1916 = vrcp.pop %v1788
        %v1917 = vrcp.pop %v1789
        %v1918 = vrcp.pop %v1790
        %v1919 = vrcp.pop %v1791
        %v1920 = vrcp.pop %v1792
        %v1921 = vrcp.pop %v1793
        %v1922 = vrcp.pop %v1794
        %v1923 = vrcp.pop %v1795
        %v1924 = vrcp.pop %v1796
        %v1925 = vrcp.pop %v1797
        %v1926 = vrcp.pop %v1798
        %v1927 = vrcp.pop %v1799
        %v1928 = vrcp.pop %v1800
        %v1929 = vrcp.pop %v1801
        %v1930 = vrcp.pop %v1802
        %v1931 = vrcp.pop %v1803
        %v1932 = vrcp.pop %v1804
        %v1933 = vrcp.pop %v1805
        %v1934 = vrcp.pop %v1806
        %v1935 = vrcp.pop %v1807
        %v1936 = vrcp.pop %v1808
        %v1937 = vrcp.pop %v1809
        %v1938 = vrcp.pop %v1810
        %v1939 = vrcp.pop %v1811
        %v1940 = vrcp.pop %v1812
        %v1941 = vrcp.pop %v1813
        %v1942 = vrcp.pop %v1814
        %v1943 = vrcp.pop %v1815
        %v1944 = vrcp.pop %v1816
        %v1945 = vrcp.pop %v1817
        %v1946 = vrcp.pop %v1818
        %v1947 = vrcp.pop %v1819
        %v1948 = vrcp.pop %v1820
        %v1949 = vrcp.pop %v1821
        %v1950 = vrcp.pop %v1822
        %v1951 = vrcp.pop %v1823
        %v1952 = vrcp.pop %v1824
        %v1953 = vrcp.pop %v1825
        %v1954 = vrcp.pop %v1826
        %v1955 = vrcp.pop %v1827
        %v1956 = vrcp.pop %v1828
        %v1957 = vrcp.pop %v1829
        %v1958 = vrcp.pop %v1830
        %v1959 = vrcp.pop %v1831
        %v1960 = vrcp.pop %v1832
        %v1961 = vrcp.pop %v1833
        %v1962 = vrcp.pop %v1834
        %v1963 = vrcp.pop %v1835
        %v1964 = vrcp.pop %v1836
        %v1965 = vrcp.pop %v1837
        %v1966 = vrcp.pop %v1838
        %v1967 = vrcp.pop %v1839
        %v1968 = vrcp.pop %v1840
        %v1969 = vrcp.pop %v1841
        %v1970 = vrcp.pop %v1842
        %v1971 = vrcp.pop %v1843
        %v1972 = vrcp.pop %v1844
        %v1973 = vrcp.pop %v1845
        %v1974 = vrcp.pop %v1846
        %v1975 = vrcp.pop %v1847
        %v1976 = vrcp.pop %v1848
        %v1977 = vrcp.pop %v1849
        %v1978 = vrcp.pop %v1850
        %v1979 = vrcp.pop %v1851
        %v1980 = vrcp.pop %v1852
        %v1981 = vrcp.pop %v1853
        %v1982 = vrcp.pop %v1854
        %v1983 = vrcp.pop %v1855
        %v1984 = vrcp.pop %v1856
        %v1985 = vrcp.pop %v1857
        %v1986 = vrcp.pop %v1858
        %v1987 = vrcp.pop %v1859
        %v1988 = vrcp.pop %v1860
        %v1989 = vrcp.pop %v1861
        %v1990 = vrcp.pop %v1862
        %v1991 = vrcp.pop %v1863
        %v1992 = vrcp.pop %v1864
        %v1993 = vrcp.pop %v1865
        %v1994 = vmul.f32 %v1226, %v1866
        %v1995 = vmul.f32 %v1227, %v1867
        %v1996 = vmul.f32 %v1228, %v1868
        %v1997 = vmul.f32 %v1229, %v1869
        %v1998 = vmul.f32 %v1230, %v1870
        %v1999 = vmul.f32 %v1231, %v1871
        %v2000 = vmul.f32 %v1232, %v1872
        %v2001 = vmul.f32 %v1233, %v1873
        %v2002 = vmul.f32 %v1234, %v1874
        %v2003 = vmul.f32 %v1235, %v1875
        %v2004 = vmul.f32 %v1236, %v1876
        %v2005 = vmul.f32 %v1237, %v1877
        %v2006 = vmul.f32 %v1238, %v1878
        %v2007 = vmul.f32 %v1239, %v1879
        %v2008 = vmul.f32 %v1240, %v1880
        %v2009 = vmul.f32 %v1241, %v1881
        %v2010 = vmul.f32 %v1242, %v1882
        %v2011 = vmul.f32 %v1243, %v1883
        %v2012 = vmul.f32 %v1244, %v1884
        %v2013 = vmul.f32 %v1245, %v1885
        %v2014 = vmul.f32 %v1246, %v1886
        %v2015 = vmul.f32 %v1247, %v1887
        %v2016 = vmul.f32 %v1248, %v1888
        %v2017 = vmul.f32 %v1249, %v1889
        %v2018 = vmul.f32 %v1250, %v1890
        %v2019 = vmul.f32 %v1251, %v1891
        %v2020 = vmul.f32 %v1252, %v1892
        %v2021 = vmul.f32 %v1253, %v1893
        %v2022 = vmul.f32 %v1254, %v1894
        %v2023 = vmul.f32 %v1255, %v1895
        %v2024 = vmul.f32 %v1256, %v1896
        %v2025 = vmul.f32 %v1257, %v1897
        %v2026 = vmul.f32 %v1258, %v1898
        %v2027 = vmul.f32 %v1259, %v1899
        %v2028 = vmul.f32 %v1260, %v1900
        %v2029 = vmul.f32 %v1261, %v1901
        %v2030 = vmul.f32 %v1262, %v1902
        %v2031 = vmul.f32 %v1263, %v1903
        %v2032 = vmul.f32 %v1264, %v1904
        %v2033 = vmul.f32 %v1265, %v1905
        %v2034 = vmul.f32 %v1266, %v1906
        %v2035 = vmul.f32 %v1267, %v1907
        %v2036 = vmul.f32 %v1268, %v1908
        %v2037 = vmul.f32 %v1269, %v1909
        %v2038 = vmul.f32 %v1270, %v1910
        %v2039 = vmul.f32 %v1271, %v1911
        %v2040 = vmul.f32 %v1272, %v1912
        %v2041 = vmul.f32 %v1273, %v1913
        %v2042 = vmul.f32 %v1274, %v1914
        %v2043 = vmul.f32 %v1275, %v1915
        %v2044 = vmul.f32 %v1276, %v1916
        %v2045 = vmul.f32 %v1277, %v1917
        %v2046 = vmul.f32 %v1278, %v1918
        %v2047 = vmul.f32 %v1279, %v1919
        %v2048 = vmul.f32 %v1280, %v1920
        %v2049 = vmul.f32 %v1281, %v1921
        %v2050 = vmul.f32 %v1282, %v1922
        %v2051 = vmul.f32 %v1283, %v1923
        %v2052 = vmul.f32 %v1284, %v1924
        %v2053 = vmul.f32 %v1285, %v1925
        %v2054 = vmul.f32 %v1286, %v1926
        %v2055 = vmul.f32 %v1287, %v1927
        %v2056 = vmul.f32 %v1288, %v1928
        %v2057 = vmul.f32 %v1289, %v1929
        %v2058 = vmul.f32 %v1290, %v1930
        %v2059 = vmul.f32 %v1291, %v1931
        %v2060 = vmul.f32 %v1292, %v1932
        %v2061 = vmul.f32 %v1293, %v1933
        %v2062 = vmul.f32 %v1294, %v1934
        %v2063 = vmul.f32 %v1295, %v1935
        %v2064 = vmul.f32 %v1296, %v1936
        %v2065 = vmul.f32 %v1297, %v1937
        %v2066 = vmul.f32 %v1298, %v1938
        %v2067 = vmul.f32 %v1299, %v1939
        %v2068 = vmul.f32 %v1300, %v1940
        %v2069 = vmul.f32 %v1301, %v1941
        %v2070 = vmul.f32 %v1302, %v1942
        %v2071 = vmul.f32 %v1303, %v1943
        %v2072 = vmul.f32 %v1304, %v1944
        %v2073 = vmul.f32 %v1305, %v1945
        %v2074 = vmul.f32 %v1306, %v1946
        %v2075 = vmul.f32 %v1307, %v1947
        %v2076 = vmul.f32 %v1308, %v1948
        %v2077 = vmul.f32 %v1309, %v1949
        %v2078 = vmul.f32 %v1310, %v1950
        %v2079 = vmul.f32 %v1311, %v1951
        %v2080 = vmul.f32 %v1312, %v1952
        %v2081 = vmul.f32 %v1313, %v1953
        %v2082 = vmul.f32 %v1314, %v1954
        %v2083 = vmul.f32 %v1315, %v1955
        %v2084 = vmul.f32 %v1316, %v1956
        %v2085 = vmul.f32 %v1317, %v1957
        %v2086 = vmul.f32 %v1318, %v1958
        %v2087 = vmul.f32 %v1319, %v1959
        %v2088 = vmul.f32 %v1320, %v1960
        %v2089 = vmul.f32 %v1321, %v1961
        %v2090 = vmul.f32 %v1322, %v1962
        %v2091 = vmul.f32 %v1323, %v1963
        %v2092 = vmul.f32 %v1324, %v1964
        %v2093 = vmul.f32 %v1325, %v1965
        %v2094 = vmul.f32 %v1326, %v1966
        %v2095 = vmul.f32 %v1327, %v1967
        %v2096 = vmul.f32 %v1328, %v1968
        %v2097 = vmul.f32 %v1329, %v1969
        %v2098 = vmul.f32 %v1330, %v1970
        %v2099 = vmul.f32 %v1331, %v1971
        %v2100 = vmul.f32 %v1332, %v1972
        %v2101 = vmul.f32 %v1333, %v1973
        %v2102 = vmul.f32 %v1334, %v1974
        %v2103 = vmul.f32 %v1335, %v1975
        %v2104 = vmul.f32 %v1336, %v1976
        %v2105 = vmul.f32 %v1337, %v1977
        %v2106 = vmul.f32 %v1338, %v1978
        %v2107 = vmul.f32 %v1339, %v1979
        %v2108 = vmul.f32 %v1340, %v1980
        %v2109 = vmul.f32 %v1341, %v1981
        %v2110 = vmul.f32 %v1342, %v1982
        %v2111 = vmul.f32 %v1343, %v1983
        %v2112 = vmul.f32 %v1344, %v1984
        %v2113 = vmul.f32 %v1345, %v1985
        %v2114 = vmul.f32 %v1346, %v1986
        %v2115 = vmul.f32 %v1347, %v1987
        %v2116 = vmul.f32 %v1348, %v1988
        %v2117 = vmul.f32 %v1349, %v1989
        %v2118 = vmul.f32 %v1350, %v1990
        %v2119 = vmul.f32 %v1351, %v1991
        %v2120 = vmul.f32 %v1352, %v1992
        %v2121 = vmul.f32 %v1353, %v1993
        %v2122 = vpack.c.bf16 %v1995, %v1994
        %v2123 = vpack.c.bf16 %v1997, %v1996
        %v2124 = vpack.c.bf16 %v1999, %v1998
        %v2125 = vpack.c.bf16 %v2001, %v2000
        %v2126 = vpack.c.bf16 %v2003, %v2002
        %v2127 = vpack.c.bf16 %v2005, %v2004
        %v2128 = vpack.c.bf16 %v2007, %v2006
        %v2129 = vpack.c.bf16 %v2009, %v2008
        %v2130 = vpack.c.bf16 %v2011, %v2010
        %v2131 = vpack.c.bf16 %v2013, %v2012
        %v2132 = vpack.c.bf16 %v2015, %v2014
        %v2133 = vpack.c.bf16 %v2017, %v2016
        %v2134 = vpack.c.bf16 %v2019, %v2018
        %v2135 = vpack.c.bf16 %v2021, %v2020
        %v2136 = vpack.c.bf16 %v2023, %v2022
        %v2137 = vpack.c.bf16 %v2025, %v2024
        %v2138 = vpack.c.bf16 %v2027, %v2026
        %v2139 = vpack.c.bf16 %v2029, %v2028
        %v2140 = vpack.c.bf16 %v2031, %v2030
        %v2141 = vpack.c.bf16 %v2033, %v2032
        %v2142 = vpack.c.bf16 %v2035, %v2034
        %v2143 = vpack.c.bf16 %v2037, %v2036
        %v2144 = vpack.c.bf16 %v2039, %v2038
        %v2145 = vpack.c.bf16 %v2041, %v2040
        %v2146 = vpack.c.bf16 %v2043, %v2042
        %v2147 = vpack.c.bf16 %v2045, %v2044
        %v2148 = vpack.c.bf16 %v2047, %v2046
        %v2149 = vpack.c.bf16 %v2049, %v2048
        %v2150 = vpack.c.bf16 %v2051, %v2050
        %v2151 = vpack.c.bf16 %v2053, %v2052
        %v2152 = vpack.c.bf16 %v2055, %v2054
        %v2153 = vpack.c.bf16 %v2057, %v2056
        %v2154 = vpack.c.bf16 %v2059, %v2058
        %v2155 = vpack.c.bf16 %v2061, %v2060
        %v2156 = vpack.c.bf16 %v2063, %v2062
        %v2157 = vpack.c.bf16 %v2065, %v2064
        %v2158 = vpack.c.bf16 %v2067, %v2066
        %v2159 = vpack.c.bf16 %v2069, %v2068
        %v2160 = vpack.c.bf16 %v2071, %v2070
        %v2161 = vpack.c.bf16 %v2073, %v2072
        %v2162 = vpack.c.bf16 %v2075, %v2074
        %v2163 = vpack.c.bf16 %v2077, %v2076
        %v2164 = vpack.c.bf16 %v2079, %v2078
        %v2165 = vpack.c.bf16 %v2081, %v2080
        %v2166 = vpack.c.bf16 %v2083, %v2082
        %v2167 = vpack.c.bf16 %v2085, %v2084
        %v2168 = vpack.c.bf16 %v2087, %v2086
        %v2169 = vpack.c.bf16 %v2089, %v2088
        %v2170 = vpack.c.bf16 %v2091, %v2090
        %v2171 = vpack.c.bf16 %v2093, %v2092
        %v2172 = vpack.c.bf16 %v2095, %v2094
        %v2173 = vpack.c.bf16 %v2097, %v2096
        %v2174 = vpack.c.bf16 %v2099, %v2098
        %v2175 = vpack.c.bf16 %v2101, %v2100
        %v2176 = vpack.c.bf16 %v2103, %v2102
        %v2177 = vpack.c.bf16 %v2105, %v2104
        %v2178 = vpack.c.bf16 %v2107, %v2106
        %v2179 = vpack.c.bf16 %v2109, %v2108
        %v2180 = vpack.c.bf16 %v2111, %v2110
        %v2181 = vpack.c.bf16 %v2113, %v2112
        %v2182 = vpack.c.bf16 %v2115, %v2114
        %v2183 = vpack.c.bf16 %v2117, %v2116
        %v2184 = vpack.c.bf16 %v2119, %v2118
        %v2185 = vpack.c.bf16 %v2121, %v2120
        %2186 = vst [vmem:[%s373] sm:$0xff] %v2122
        %2187 = vst [vmem:[%s373 + $0x8] sm:$0xff] %v2123
        %2188 = vst [vmem:[%s373 + $0x10] sm:$0xff] %v2124
        %2189 = vst [vmem:[%s373 + $0x18] sm:$0xff] %v2125
        %2190 = vst [vmem:[%s373 + $0x20] sm:$0xff] %v2126
        %2191 = vst [vmem:[%s373 + $0x28] sm:$0xff] %v2127
        %2192 = vst [vmem:[%s373 + $0x30] sm:$0xff] %v2128
        %2193 = vst [vmem:[%s373 + $0x38] sm:$0xff] %v2129
        %2194 = vst [vmem:[%s373 + $0x40] sm:$0xff] %v2130
        %2195 = vst [vmem:[%s373 + $0x48] sm:$0xff] %v2131
        %2196 = vst [vmem:[%s373 + $0x50] sm:$0xff] %v2132
        %2197 = vst [vmem:[%s373 + $0x58] sm:$0xff] %v2133
        %2198 = vst [vmem:[%s373 + $0x60] sm:$0xff] %v2134
        %2199 = vst [vmem:[%s373 + $0x68] sm:$0xff] %v2135
        %2200 = vst [vmem:[%s373 + $0x70] sm:$0xff] %v2136
        %2201 = vst [vmem:[%s373 + $0x78] sm:$0xff] %v2137
        %2202 = vst [vmem:[%s373 + $0x80] sm:$0xff] %v2138
        %2203 = vst [vmem:[%s373 + $0x88] sm:$0xff] %v2139
        %2204 = vst [vmem:[%s373 + $0x90] sm:$0xff] %v2140
        %2205 = vst [vmem:[%s373 + $0x98] sm:$0xff] %v2141
        %2206 = vst [vmem:[%s373 + $0xa0] sm:$0xff] %v2142
        %2207 = vst [vmem:[%s373 + $0xa8] sm:$0xff] %v2143
        %2208 = vst [vmem:[%s373 + $0xb0] sm:$0xff] %v2144
        %2209 = vst [vmem:[%s373 + $0xb8] sm:$0xff] %v2145
        %2210 = vst [vmem:[%s373 + $0xc0] sm:$0xff] %v2146
        %2211 = vst [vmem:[%s373 + $0xc8] sm:$0xff] %v2147
        %2212 = vst [vmem:[%s373 + $0xd0] sm:$0xff] %v2148
        %2213 = vst [vmem:[%s373 + $0xd8] sm:$0xff] %v2149
        %2214 = vst [vmem:[%s373 + $0xe0] sm:$0xff] %v2150
        %2215 = vst [vmem:[%s373 + $0xe8] sm:$0xff] %v2151
        %2216 = vst [vmem:[%s373 + $0xf0] sm:$0xff] %v2152
        %2217 = vst [vmem:[%s373 + $0xf8] sm:$0xff] %v2153
        %2218 = vst [vmem:[%s373 + $0x100] sm:$0xff] %v2154
        %2219 = vst [vmem:[%s373 + $0x108] sm:$0xff] %v2155
        %2220 = vst [vmem:[%s373 + $0x110] sm:$0xff] %v2156
        %2221 = vst [vmem:[%s373 + $0x118] sm:$0xff] %v2157
        %2222 = vst [vmem:[%s373 + $0x120] sm:$0xff] %v2158
        %2223 = vst [vmem:[%s373 + $0x128] sm:$0xff] %v2159
        %2224 = vst [vmem:[%s373 + $0x130] sm:$0xff] %v2160
        %2225 = vst [vmem:[%s373 + $0x138] sm:$0xff] %v2161
        %2226 = vst [vmem:[%s373 + $0x140] sm:$0xff] %v2162
        %2227 = vst [vmem:[%s373 + $0x148] sm:$0xff] %v2163
        %2228 = vst [vmem:[%s373 + $0x150] sm:$0xff] %v2164
        %2229 = vst [vmem:[%s373 + $0x158] sm:$0xff] %v2165
        %2230 = vst [vmem:[%s373 + $0x160] sm:$0xff] %v2166
        %2231 = vst [vmem:[%s373 + $0x168] sm:$0xff] %v2167
        %2232 = vst [vmem:[%s373 + $0x170] sm:$0xff] %v2168
        %2233 = vst [vmem:[%s373 + $0x178] sm:$0xff] %v2169
        %2234 = vst [vmem:[%s373 + $0x180] sm:$0xff] %v2170
        %2235 = vst [vmem:[%s373 + $0x188] sm:$0xff] %v2171
        %2236 = vst [vmem:[%s373 + $0x190] sm:$0xff] %v2172
        %2237 = vst [vmem:[%s373 + $0x198] sm:$0xff] %v2173
        %2238 = vst [vmem:[%s373 + $0x1a0] sm:$0xff] %v2174
        %2239 = vst [vmem:[%s373 + $0x1a8] sm:$0xff] %v2175
        %2240 = vst [vmem:[%s373 + $0x1b0] sm:$0xff] %v2176
        %2241 = vst [vmem:[%s373 + $0x1b8] sm:$0xff] %v2177
        %2242 = vst [vmem:[%s373 + $0x1c0] sm:$0xff] %v2178
        %2243 = vst [vmem:[%s373 + $0x1c8] sm:$0xff] %v2179
        %2244 = vst [vmem:[%s373 + $0x1d0] sm:$0xff] %v2180
        %2245 = vst [vmem:[%s373 + $0x1d8] sm:$0xff] %v2181
        %2246 = vst [vmem:[%s373 + $0x1e0] sm:$0xff] %v2182
        %2247 = vst [vmem:[%s373 + $0x1e8] sm:$0xff] %v2183
        %2248 = vst [vmem:[%s373 + $0x1f0] sm:$0xff] %v2184
        %2249 = vst [vmem:[%s373 + $0x1f8] sm:$0xff] %v2185
        %s2250 = sand.u32 %s153, 1
        %s2251 = scalar_lea.sflag [#allocation4], %s2250
        %s2252 = sand.u32 %s153, 1
        %s2253 = smul.addr %s2252, 512
        %s2254 = scalar_lea.vmem [#allocation10], %s2253
        // Predicated region
        $region53: #{tpu_custom_call.1} parent=35 // pred_check
          %p2255 = pneg %p163
        $region54: #{tpu_custom_call.1} parent=35 // pred_check_branch
          %2257 = sbr.rel (%p2255) target = $region56
        $region55: #{tpu_custom_call.1} parent=35 // pred_region
          %s2258 = smul.u32 32, %s32
          %s2259 = smul.u32 4, %s31
          %s2260 = ssub.s32 38, %s2258
          %p2261 = scmp.lt.s32.totalorder %s2260, 32
          %s2262 = scalar_select %p2261, %s2260, 32
          %s2263 = smul.u32 4, %s2262
          %s2264 = ssub.s32 5, %s2259
          %p2265 = scmp.lt.s32.totalorder %s2264, 4
          %s2266 = scalar_select %p2265, %s2264, 4
          %s2267 = smul.u32 %s2263, %s2266
          %s2268 = ssub.s32 512, %s2267
          %s2269 = sshll.u32 %s2268, 4
          %2270 = vsyncadd %s2251, %s2269
          %p2271 = scmp.ne.s32.totalorder 0, %s2267
          %s2272 = smul.addr %s2258, 5
          %s2273 = sadd.s32 %s2259, %s2272
          %s2274 = smul.addr %s2273, 4
          %s2275 = scalar_lea.hbm %s4, %s2274
          %s2276 = smul.u32 %s2266, 4
          %s2277 = smul.u32 %s2276, %s2262
          %s2278 = sshll.u32 %s2254, 4
          %s2279 = int_to_ptr.vmem [resolvable:$true] %s2278
          %s2280 = sshll.u32 %s2275, 4
          %s2281 = int_to_ptr.hbm [resolvable:$true] %s2280
          %s2282 = sshll.u32 %s2277, 4
          %2286 = dma.vmem_to_hbm [thread:$0]  (%p2271), %s2279, %s2282, %s2281, %s2251, 256, 320, %s2276
        $region56: #{tpu_custom_call.1} parent=35 // pred_fallthru
          _
      $region36: #{tpu_custom_call.1} parent=5 // pred_fallthru
        _
      %p2287 = scmp.le.s32.totalorder 2, %s22
      // Predicated region
      $region57: #{tpu_custom_call.1} parent=5 // pred_check
        %p2288 = pneg %p2287
      $region58: #{tpu_custom_call.1} parent=5 // pred_check_branch
        %2290 = sbr.rel (%p2288) target = $region60
      $region59: #{tpu_custom_call.1} parent=5 // pred_region
        %s2291 = ssub.s32 %s22, 2
        // Predicated region
        $region61: #{tpu_custom_call.1} parent=59 // pred_check
          %p2292 = pneg %p169
        $region62: #{tpu_custom_call.1} parent=59 // pred_check_branch
          %2294 = sbr.rel (%p2292) target = $region64
        $region63: #{tpu_custom_call.1} parent=59 // pred_region
          %s2295 = sand.u32 %s154, 1
          %s2296 = scalar_lea.sflag [#allocation4], %s2295
          %s2297 = sand.u32 %s154, 1
          %s2298 = smul.addr %s2297, 512
          %s2299 = scalar_lea.vmem [#allocation10], %s2298
          %2301 = dma.done %s2296, 8192
        $region64: #{tpu_custom_call.1} parent=59 // pred_fallthru
          _
      $region60: #{tpu_custom_call.1} parent=5 // pred_fallthru
        _
    $region6: #{tpu_custom_call.1} parent=1 // loop_footer
      %s26 = sadd.s32 1, %s22
    $region7: #{tpu_custom_call.1} parent=1 // loop_footer_branch
      %21 = sbr.rel target = $region3
    $region8: #{tpu_custom_call.1} parent=1 // loop_exit
      _
    %2302 = vsyncpa [#allocation3], 1
    %s2303 = scalar_lea.sflag [#allocation3], 1
    %2304 = vsyncpa %s2303, 1
    %2305 = vsyncpa [#allocation6], 1
    %s2306 = scalar_lea.sflag [#allocation6], 1
    %2307 = vsyncpa %s2306, 1
    %2308 = vsyncpa [#allocation9], 1
    %s2309 = scalar_lea.sflag [#allocation9], 1
    %2310 = vsyncpa %s2309, 1
    %2311 = vsyncpa [#allocation4], 1
    %s2312 = scalar_lea.sflag [#allocation4], 1
    %2313 = vsyncpa %s2312, 1

</llo_original>
